<compile_context>
chip_gen: v7x
topology: tpu7x:2x2x1
jax: 0.10.0
libtpu: 0.0.40
codegen_flags: <defaults>
</compile_context>

<pallas_src>
import numpy as np
import jax
import jax.numpy as jnp
from jax.experimental import pallas as pl
from jax.experimental.pallas import tpu as pltpu

EPS = 1e-5
KMAX = 9           # all depthwise kernels (3,5,7,9) packed, centered, into 9 taps
PAD = KMAX // 2
NEG_INF = -1e30


def make_scsa_kernel(BB, C, H, W, head_dim, group_chans, window_size):
    L2 = H + W
    HW = H * W
    N = (H // window_size) * (W // window_size)
    BC = BB * C
    scaler = float(head_dim) ** -0.5
    inv_nH = 1.0 / float(group_chans * H)
    inv_nW = 1.0 / float(group_chans * W)
    inv_totN = 1.0 / float(C * N)
    inv_N = 1.0 / float(N)

    def kernel(x_ref, ms_ref, r_ref, ehw_ref, pool_ref,
               wbig_ref, gnhw_ref, pv_ref, masks_ref, out_ref):
        f32 = jnp.float32
        x = x_ref[...]                                                   # (BC, HW)

        # lane selector for the H-half of the concatenated (H | W) axis
        lane_h = (jax.lax.broadcasted_iota(jnp.int32, (1, L2), 1) < H).astype(f32)

        # packed per-channel scalars: [bdwc, gn_w, gn_b, wq, wk, wv, pad, pad]
        bdwc = pv_ref[:, 0:1]
        gn_w = pv_ref[:, 1:2]
        gn_b = pv_ref[:, 2:3]
        wq = pv_ref[:, 3:4]
        wk = pv_ref[:, 4:5]
        wv = pv_ref[:, 5:6]

        # packed block-diagonal masks (sublane-aligned slices)
        gmask = masks_ref[0:BC, :]            # group-norm(4) groups
        bmask = masks_ref[BC:2 * BC, :]       # per-batch blocks (GroupNorm(1))
        hbias = masks_ref[2 * BC:3 * BC, :]   # additive head mask (0 / -1e30)

        # --- fused per-axis means + 9 masked tap shifts: ONE matmul -------------
        shifted = jnp.dot(x, ms_ref[...], preferred_element_type=f32)   # (BC, 9*L2)
        # depthwise conv1d (both H and W branches) = weight * shifted, tap-summed
        conv = jnp.dot(wbig_ref[...] * shifted, r_ref[...],
                       preferred_element_type=f32) + bdwc               # (BC, L2)

        # --- GroupNorm(4) over the H half and the W half -------------------------
        conv2 = conv * conv
        gsum = jnp.dot(gmask, conv, preferred_element_type=f32)         # (BC, L2)
        gsum2 = jnp.dot(gmask, conv2, preferred_element_type=f32)       # (BC, L2)
        sH = jnp.sum(gsum * lane_h, axis=-1, keepdims=True)             # (BC, 1)
        sW = jnp.sum(gsum, axis=-1, keepdims=True) - sH
        qH = jnp.sum(gsum2 * lane_h, axis=-1, keepdims=True)
        qW = jnp.sum(gsum2, axis=-1, keepdims=True) - qH
        mean = sW * inv_nW + (sH * inv_nH - sW * inv_nW) * lane_h       # (BC, L2)
        ex2 = qW * inv_nW + (qH * inv_nH - qW * inv_nW) * lane_h
        var = ex2 - mean * mean
        gnw = gnhw_ref[0:BC, :]
        gnb = gnhw_ref[BC:2 * BC, :]
        gate = jax.nn.sigmoid((conv - mean) * jax.lax.rsqrt(var + EPS) * gnw + gnb)

        # --- spatial modulation: single merged expansion matmul ------------------
        ehw = jnp.dot(gate, ehw_ref[...], preferred_element_type=f32)   # (BC, 2*HW)
        x_mod = x * ehw[:, :HW] * ehw[:, HW:]                           # 128-aligned slices

        # --- AvgPool2d(window, stride=window) as a matmul ------------------------
        y = jnp.dot(x_mod, pool_ref[...], preferred_element_type=f32)   # (BC, N)

        # --- GroupNorm(1, C) per batch --------------------------------------------
        y2 = y * y
        bsum = jnp.dot(bmask, y, preferred_element_type=f32)            # (BC, N)
        bsum2 = jnp.dot(bmask, y2, preferred_element_type=f32)          # (BC, N)
        mu = jnp.sum(bsum, axis=-1, keepdims=True) * inv_totN
        ex2_1 = jnp.sum(bsum2, axis=-1, keepdims=True) * inv_totN
        var1 = ex2_1 - mu * mu
        y_n = (y - mu) * jax.lax.rsqrt(var1 + EPS) * gn_w + gn_b

        # --- depthwise 1x1 q/k/v, per-head attention (block-diag additive bias) ---
        q = y_n * wq
        k = y_n * wk
        v = y_n * wv
        att = jax.lax.dot_general(q, k, (((1,), (1,)), ((), ())),
                                  preferred_element_type=f32) * scaler  # (BC, BC)
        att = att + hbias
        mx = jnp.max(att, axis=-1, keepdims=True)
        e = jnp.exp(att - mx)
        att = e * pl.reciprocal(jnp.sum(e, axis=-1, keepdims=True), approx=True)
        o = jnp.dot(att, v, preferred_element_type=f32)                 # (BC, N)

        # --- channel gate and final multiply ---------------------------------------
        ca = jax.nn.sigmoid(jnp.sum(o, axis=-1, keepdims=True) * inv_N)  # (BC, 1)
        out_ref[...] = ca * x_mod

    return kernel


def build_consts(BB, C, H, W, ws, group_chans, head_dim, params):
    """Host-side constant matrices for the batch-stacked, fully-fused kernel."""
    HW = H * W
    L2 = H + W
    h2, w2 = H // ws, W // ws
    N = h2 * w2
    BC = BB * C

    r = np.arange(HW) // W
    s = np.arange(HW) % W

    # per-axis mean matrices (HW -> H | W), concatenated
    Mh = (r[:, None] == np.arange(H)[None, :]).astype(np.float32) / W       # (HW, H)
    Mw = (s[:, None] == np.arange(W)[None, :]).astype(np.float32) / H       # (HW, W)
    Mhw = np.concatenate([Mh, Mw], axis=1)                                  # (HW, L2)

    # tap shift/mask matrix: 9 zero-padded shifts of the concatenated mean vector,
    # segment boundaries respected (H half and W half never mix).
    S = np.zeros((L2, KMAX * L2), np.float32)
    for j in range(KMAX):
        d = j - PAD
        for l in range(L2):
            src = l + d
            if l < H:
                if 0 <= src < H:
                    S[src, j * L2 + l] = 1.0
            else:
                if H <= src < L2:
                    S[src, j * L2 + l] = 1.0
    MS = Mhw @ S                                                            # (HW, 9*L2)
    R = np.tile(np.eye(L2, dtype=np.float32), (KMAX, 1))                    # (9*L2, L2)

    # merged zero-padded expansion matrices (attn_h -> HW | attn_w -> HW)
    EhP = np.zeros((L2, HW), np.float32)
    EwP = np.zeros((L2, HW), np.float32)
    EhP[:H, :] = (np.arange(H)[:, None] == r[None, :]).astype(np.float32)
    EwP[H:, :] = (np.arange(W)[:, None] == s[None, :]).astype(np.float32)
    Ehw = np.concatenate([EhP, EwP], axis=1)                                # (L2, 2*HW)

    # avg-pool matrix
    pidx = (r // ws) * w2 + (s // ws)
    Pool = (pidx[:, None] == np.arange(N)[None, :]).astype(np.float32) / (ws * ws)

    # block-diagonal structure over the stacked (batch*channel) sublanes, packed
    ch = np.arange(BC)
    gmask = (ch[:, None] // group_chans == ch[None, :] // group_chans).astype(np.float32)
    bmask = (ch[:, None] // C == ch[None, :] // C).astype(np.float32)
    hbias = np.where(ch[:, None] // head_dim == ch[None, :] // head_dim,
                     0.0, NEG_INF).astype(np.float32)
    masks = np.concatenate([gmask, bmask, hbias], axis=0)                   # (3*BC, BC)

    def rep(a):                  # replicate per-channel params over stacked batches
        return np.tile(np.asarray(a, np.float32), (BB, 1))

    wbig = rep(np.repeat(np.asarray(params["wdwc"], np.float32), L2, axis=1))  # (BC, 9*L2)
    gnhw_w = rep(np.concatenate(
        [np.repeat(np.asarray(params["gnh_w"], np.float32), H, axis=1),
         np.repeat(np.asarray(params["gnw_w"], np.float32), W, axis=1)], axis=1))
    gnhw_b = rep(np.concatenate(
        [np.repeat(np.asarray(params["gnh_b"], np.float32), H, axis=1),
         np.repeat(np.asarray(params["gnw_b"], np.float32), W, axis=1)], axis=1))
    gnhw = np.concatenate([gnhw_w, gnhw_b], axis=0)                         # (2*BC, L2)

    # packed per-channel scalars: [bdwc, gn_w, gn_b, wq, wk, wv, pad, pad]
    pv = np.concatenate([rep(params["bdwc"]), rep(params["gn_w"]), rep(params["gn_b"]),
                         rep(params["wq"]), rep(params["wk"]), rep(params["wv"]),
                         np.zeros((BC, 2), np.float32)], axis=1)            # (BC, 8)

    consts = dict(MS=MS, R=R, Ehw=Ehw, Pool=Pool,
                  wbig=wbig, gnhw=gnhw, pv=pv, masks=masks)
    return {k: jnp.asarray(v, jnp.float32) for k, v in consts.items()}


def _batch_splits(B):
    """2-way batch split on v7x (2 TensorCores/chip); single grid step otherwise."""
    try:
        kind = jax.devices()[0].device_kind.lower()
    except Exception:
        kind = ""
    if B % 2 == 0 and "v7" in kind:
        return 2
    return 1


def init_params(key, C):
    """Deterministic synthetic parameters matching SCSA's __init__ shapes."""
    gc = C // 4
    ks = [3, 5, 7, 9]
    keys = jax.random.split(key, 2 * len(ks) + 3)
    wdwc = np.zeros((C, KMAX), np.float32)
    bdwc = np.zeros((C, 1), np.float32)
    for gi, k in enumerate(ks):
        w = np.asarray(jax.random.uniform(keys[2 * gi], (gc, k), minval=-0.5, maxval=0.5))
        b = np.asarray(jax.random.uniform(keys[2 * gi + 1], (gc,), minval=-0.2, maxval=0.2))
        pad = (KMAX - k) // 2
        wdwc[gi * gc:(gi + 1) * gc, pad:pad + k] = w
        bdwc[gi * gc:(gi + 1) * gc, 0] = b
    wq = np.asarray(jax.random.uniform(keys[-3], (C, 1), minval=-1.0, maxval=1.0))
    wk = np.asarray(jax.random.uniform(keys[-2], (C, 1), minval=-1.0, maxval=1.0))
    wv = np.asarray(jax.random.uniform(keys[-1], (C, 1), minval=-1.0, maxval=1.0))
    ones = np.ones((C, 1), np.float32)
    zeros = np.zeros((C, 1), np.float32)
    p = dict(wdwc=wdwc, bdwc=bdwc,
             gnh_w=ones.copy(), gnh_b=zeros.copy(),
             gnw_w=ones.copy(), gnw_b=zeros.copy(),
             gn_w=ones.copy(), gn_b=zeros.copy(),
             wq=wq, wk=wk, wv=wv)
    return {k: jnp.asarray(v, jnp.float32) for k, v in p.items()}


def scsa_forward(x, params, head_num, window_size):
    B, C, H, W = x.shape
    head_dim = C // head_num
    group_chans = C // 4
    HW = H * W
    splits = _batch_splits(B)
    BB = B // splits             # batches stacked per grid step
    BC = BB * C

    consts = build_consts(BB, C, H, W, window_size, group_chans, head_dim, params)
    x_flat = x.reshape(B * C, HW).astype(jnp.float32)

    kernel = make_scsa_kernel(BB, C, H, W, head_dim, group_chans, window_size)

    const_names = ["MS", "R", "Ehw", "Pool", "wbig", "gnhw", "pv", "masks"]
    const_args = tuple(consts[n] for n in const_names)
    args = (x_flat,) + const_args

    in_specs = ([pl.BlockSpec((BC, HW), lambda i: (i, 0))]
                + [pl.BlockSpec(a.shape, lambda i: (0, 0)) for a in const_args])

    out_flat = pl.pallas_call(
        kernel,
        out_shape=jax.ShapeDtypeStruct((B * C, HW), jnp.float32),
        grid_spec=pltpu.PrefetchScalarGridSpec(
            num_scalar_prefetch=0,
            grid=(splits,),                      # (2,) on v7x, (1,) on v5e/v6e
            in_specs=in_specs,
            out_specs=pl.BlockSpec((BC, HW), lambda i: (i, 0)),
        ),
        compiler_params=pltpu.CompilerParams(
            dimension_semantics=("parallel",),
            vmem_limit_bytes=32 * 1024 * 1024,   # explicit scaling guard (tiny kernel today)
        ),
    )(*args)

    return out_flat.reshape(B, C, H, W)


def scsa_reference(x, params, head_num, window_size):
    """Pure-JAX reference of the PyTorch forward (for correctness check)."""
    B, C, H, W = x.shape
    head_dim = C // head_num
    scaler = head_dim ** -0.5
    wdwc, bdwc = params["wdwc"], params["bdwc"][:, 0]

    x_h = x.mean(axis=3)   # (B, C, H)
    x_w = x.mean(axis=2)   # (B, C, W)

    def dwconv(v):
        L = v.shape[-1]
        vp = jnp.pad(v, ((0, 0), (0, 0), (PAD, PAD)))
        out = jnp.zeros_like(v)
        for j in range(KMAX):
            out = out + wdwc[None, :, j, None] * vp[:, :, j:j + L]
        return out + bdwc[None, :, None]

    def gn(v, G, w, b):
        B_, C_, L_ = v.shape
        vr = v.reshape(B_, G, (C_ // G) * L_)
        mean = vr.mean(-1, keepdims=True)
        var = vr.var(-1, keepdims=True)
        vn = ((vr - mean) / jnp.sqrt(var + EPS)).reshape(B_, C_, L_)
        return vn * w[None, :, None] + b[None, :, None]

    attn_h = jax.nn.sigmoid(gn(dwconv(x_h), 4, params["gnh_w"][:, 0], params["gnh_b"][:, 0]))
    attn_w = jax.nn.sigmoid(gn(dwconv(x_w), 4, params["gnw_w"][:, 0], params["gnw_b"][:, 0]))
    x_mod = x * attn_h[:, :, :, None] * attn_w[:, :, None, :]

    ws = window_size
    h2, w2 = H // ws, W // ws
    y = x_mod.reshape(B, C, h2, ws, w2, ws).mean(axis=(3, 5))    # (B, C, h2, w2)
    yf = y.reshape(B, C, h2 * w2)

    mu = yf.reshape(B, -1).mean(-1)[:, None, None]
    var = yf.reshape(B, -1).var(-1)[:, None, None]
    yn = (yf - mu) / jnp.sqrt(var + EPS) * params["gn_w"][None] + params["gn_b"][None]

    q = yn * params["wq"][None]
    k = yn * params["wk"][None]
    v = yn * params["wv"][None]
    qr = q.reshape(B, head_num, head_dim, -1)
    kr = k.reshape(B, head_num, head_dim, -1)
    vr = v.reshape(B, head_num, head_dim, -1)
    att = jnp.einsum('bhdn,bhen->bhde', qr, kr) * scaler
    att = jax.nn.softmax(att, axis=-1)
    o = jnp.einsum('bhde,bhen->bhdn', att, vr)
    ca = jax.nn.sigmoid(o.reshape(B, C, -1).mean(-1))            # (B, C)
    return ca[:, :, None, None] * x_mod


if __name__ == "__main__":
    # SCSA(dim=16, head_num=4, window_size=4), input (B, C, H, W) = (2, 16, 16, 16)
    B, C, H, W = 2, 16, 16, 16
    head_num, window_size = 4, 4

    key = jax.random.PRNGKey(0)
    kx, kp = jax.random.split(key)
    x = jax.random.normal(kx, (B, C, H, W), dtype=jnp.float32)
    params = init_params(kp, C)

    out = scsa_forward(x, params, head_num, window_size)
    out = jax.block_until_ready(out)

    ref = scsa_reference(x, params, head_num, window_size)
    np.testing.assert_allclose(np.asarray(out), np.asarray(ref), rtol=1e-3, atol=1e-3)

    print("KERNEL_OK")
</pallas_src>

<mosaic_0001>
module attributes {stable_mosaic.version = 11 : i64} {
  func.func @kernel(%arg0: i32, %arg1: memref<32x256xf32, #tpu.memory_space<vmem>>, %arg2: memref<256x288xf32, #tpu.memory_space<vmem>>, %arg3: memref<288x32xf32, #tpu.memory_space<vmem>>, %arg4: memref<32x512xf32, #tpu.memory_space<vmem>>, %arg5: memref<256x16xf32, #tpu.memory_space<vmem>>, %arg6: memref<32x288xf32, #tpu.memory_space<vmem>>, %arg7: memref<64x32xf32, #tpu.memory_space<vmem>>, %arg8: memref<32x8xf32, #tpu.memory_space<vmem>>, %arg9: memref<96x32xf32, #tpu.memory_space<vmem>>, %arg10: memref<32x256xf32, #tpu.memory_space<vmem>>) attributes {dimension_semantics = [#tpu.dimension_semantics<parallel>], iteration_bounds = array<i64: 1>, scalar_prefetch = 0 : i64, scratch_operands = 0 : i64, tpu.core_type = #tpu.core_type<tc>, window_params = [{transform_indices = @transform_0, window_bounds = array<i64: 32, 256>}, {pipeline_mode = #tpu.pipeline_mode<synchronous>, transform_indices = @transform_1, window_bounds = array<i64: 256, 288>}, {pipeline_mode = #tpu.pipeline_mode<synchronous>, transform_indices = @transform_2, window_bounds = array<i64: 288, 32>}, {pipeline_mode = #tpu.pipeline_mode<synchronous>, transform_indices = @transform_3, window_bounds = array<i64: 32, 512>}, {pipeline_mode = #tpu.pipeline_mode<synchronous>, transform_indices = @transform_4, window_bounds = array<i64: 256, 16>}, {pipeline_mode = #tpu.pipeline_mode<synchronous>, transform_indices = @transform_5, window_bounds = array<i64: 32, 288>}, {pipeline_mode = #tpu.pipeline_mode<synchronous>, transform_indices = @transform_6, window_bounds = array<i64: 64, 32>}, {pipeline_mode = #tpu.pipeline_mode<synchronous>, transform_indices = @transform_7, window_bounds = array<i64: 32, 8>}, {pipeline_mode = #tpu.pipeline_mode<synchronous>, transform_indices = @transform_8, window_bounds = array<i64: 96, 32>}, {transform_indices = @transform_9, window_bounds = array<i64: 32, 256>}]} {
    %c0 = arith.constant 0 : index
    %c0_0 = arith.constant 0 : index
    %0 = vector.load %arg1[%c0, %c0_0] : memref<32x256xf32, #tpu.memory_space<vmem>>, vector<32x256xf32>
    %1 = tpu.iota {dimensions = array<i32: 1>} : vector<1x32xi32>
    %c16_i32 = arith.constant 16 : i32
    %2 = vector.broadcast %c16_i32 : i32 to vector<1x32xi32>
    %3 = arith.cmpi slt, %1, %2 : vector<1x32xi32>
    %4 = arith.extui %3 : vector<1x32xi1> to vector<1x32xi32>
    %5 = arith.sitofp %4 : vector<1x32xi32> to vector<1x32xf32>
    %c0_1 = arith.constant 0 : index
    %c0_2 = arith.constant 0 : index
    %6 = vector.load %arg8[%c0_1, %c0_2] : memref<32x8xf32, #tpu.memory_space<vmem>>, vector<32x1xf32>
    %c0_3 = arith.constant 0 : index
    %c1 = arith.constant 1 : index
    %7 = vector.load %arg8[%c0_3, %c1] : memref<32x8xf32, #tpu.memory_space<vmem>>, vector<32x1xf32>
    %c0_4 = arith.constant 0 : index
    %c2 = arith.constant 2 : index
    %8 = vector.load %arg8[%c0_4, %c2] : memref<32x8xf32, #tpu.memory_space<vmem>>, vector<32x1xf32>
    %c0_5 = arith.constant 0 : index
    %c3 = arith.constant 3 : index
    %9 = vector.load %arg8[%c0_5, %c3] : memref<32x8xf32, #tpu.memory_space<vmem>>, vector<32x1xf32>
    %c0_6 = arith.constant 0 : index
    %c4 = arith.constant 4 : index
    %10 = vector.load %arg8[%c0_6, %c4] : memref<32x8xf32, #tpu.memory_space<vmem>>, vector<32x1xf32>
    %c0_7 = arith.constant 0 : index
    %c5 = arith.constant 5 : index
    %11 = vector.load %arg8[%c0_7, %c5] : memref<32x8xf32, #tpu.memory_space<vmem>>, vector<32x1xf32>
    %c0_8 = arith.constant 0 : index
    %c0_9 = arith.constant 0 : index
    %12 = vector.load %arg9[%c0_8, %c0_9] : memref<96x32xf32, #tpu.memory_space<vmem>>, vector<32x32xf32>
    %c32 = arith.constant 32 : index
    %c0_10 = arith.constant 0 : index
    %13 = vector.load %arg9[%c32, %c0_10] : memref<96x32xf32, #tpu.memory_space<vmem>>, vector<32x32xf32>
    %c64 = arith.constant 64 : index
    %c0_11 = arith.constant 0 : index
    %14 = vector.load %arg9[%c64, %c0_11] : memref<96x32xf32, #tpu.memory_space<vmem>>, vector<32x32xf32>
    %c0_12 = arith.constant 0 : index
    %c0_13 = arith.constant 0 : index
    %15 = vector.load %arg2[%c0_12, %c0_13] : memref<256x288xf32, #tpu.memory_space<vmem>>, vector<256x288xf32>
    %cst = arith.constant dense<0.000000e+00> : vector<32x288xf32>
    %16 = tpu.matmul %0, %15, %cst {dimension_numbers = #tpu.dot_dimension_numbers<[1], [0], [0], [1], [0, 0, 1, 1], [], []>} : vector<32x256xf32>, vector<256x288xf32>, vector<32x288xf32> -> vector<32x288xf32>
    %c0_14 = arith.constant 0 : index
    %c0_15 = arith.constant 0 : index
    %17 = vector.load %arg6[%c0_14, %c0_15] : memref<32x288xf32, #tpu.memory_space<vmem>>, vector<32x288xf32>
    %18 = arith.mulf %17, %16 : vector<32x288xf32>
    %c0_16 = arith.constant 0 : index
    %c0_17 = arith.constant 0 : index
    %19 = vector.load %arg3[%c0_16, %c0_17] : memref<288x32xf32, #tpu.memory_space<vmem>>, vector<288x32xf32>
    %cst_18 = arith.constant dense<0.000000e+00> : vector<32x32xf32>
    %20 = tpu.matmul %18, %19, %cst_18 {dimension_numbers = #tpu.dot_dimension_numbers<[1], [0], [0], [1], [0, 0, 1, 1], [], []>} : vector<32x288xf32>, vector<288x32xf32>, vector<32x32xf32> -> vector<32x32xf32>
    %21 = vector.broadcast %6 : vector<32x1xf32> to vector<32x32xf32>
    %22 = arith.addf %20, %21 : vector<32x32xf32>
    %23 = arith.mulf %22, %22 : vector<32x32xf32>
    %cst_19 = arith.constant dense<0.000000e+00> : vector<32x32xf32>
    %24 = tpu.matmul %12, %22, %cst_19 {dimension_numbers = #tpu.dot_dimension_numbers<[1], [0], [0], [1], [0, 0, 1, 1], [], []>} : vector<32x32xf32>, vector<32x32xf32>, vector<32x32xf32> -> vector<32x32xf32>
    %cst_20 = arith.constant dense<0.000000e+00> : vector<32x32xf32>
    %25 = tpu.matmul %12, %23, %cst_20 {dimension_numbers = #tpu.dot_dimension_numbers<[1], [0], [0], [1], [0, 0, 1, 1], [], []>} : vector<32x32xf32>, vector<32x32xf32>, vector<32x32xf32> -> vector<32x32xf32>
    %26 = vector.broadcast %5 : vector<1x32xf32> to vector<32x32xf32>
    %27 = arith.mulf %24, %26 : vector<32x32xf32>
    %cst_21 = arith.constant dense<0.000000e+00> : vector<32xf32>
    %28 = vector.multi_reduction <add>, %27, %cst_21 [1] : vector<32x32xf32> to vector<32xf32>
    %29 = vector.shape_cast %28 : vector<32xf32> to vector<32x1xf32>
    %cst_22 = arith.constant dense<0.000000e+00> : vector<32xf32>
    %30 = vector.multi_reduction <add>, %24, %cst_22 [1] : vector<32x32xf32> to vector<32xf32>
    %31 = vector.shape_cast %30 : vector<32xf32> to vector<32x1xf32>
    %32 = arith.subf %31, %29 : vector<32x1xf32>
    %33 = vector.broadcast %5 : vector<1x32xf32> to vector<32x32xf32>
    %34 = arith.mulf %25, %33 : vector<32x32xf32>
    %cst_23 = arith.constant dense<0.000000e+00> : vector<32xf32>
    %35 = vector.multi_reduction <add>, %34, %cst_23 [1] : vector<32x32xf32> to vector<32xf32>
    %36 = vector.shape_cast %35 : vector<32xf32> to vector<32x1xf32>
    %cst_24 = arith.constant dense<0.000000e+00> : vector<32xf32>
    %37 = vector.multi_reduction <add>, %25, %cst_24 [1] : vector<32x32xf32> to vector<32xf32>
    %38 = vector.shape_cast %37 : vector<32xf32> to vector<32x1xf32>
    %39 = arith.subf %38, %36 : vector<32x1xf32>
    %cst_25 = arith.constant 1.562500e-02 : f32
    %40 = vector.broadcast %cst_25 : f32 to vector<32x1xf32>
    %41 = arith.mulf %32, %40 : vector<32x1xf32>
    %cst_26 = arith.constant 1.562500e-02 : f32
    %42 = vector.broadcast %cst_26 : f32 to vector<32x1xf32>
    %43 = arith.mulf %29, %42 : vector<32x1xf32>
    %cst_27 = arith.constant 1.562500e-02 : f32
    %44 = vector.broadcast %cst_27 : f32 to vector<32x1xf32>
    %45 = arith.mulf %32, %44 : vector<32x1xf32>
    %46 = arith.subf %43, %45 : vector<32x1xf32>
    %47 = vector.broadcast %46 : vector<32x1xf32> to vector<32x32xf32>
    %48 = vector.broadcast %5 : vector<1x32xf32> to vector<32x32xf32>
    %49 = arith.mulf %47, %48 : vector<32x32xf32>
    %50 = vector.broadcast %41 : vector<32x1xf32> to vector<32x32xf32>
    %51 = arith.addf %50, %49 : vector<32x32xf32>
    %cst_28 = arith.constant 1.562500e-02 : f32
    %52 = vector.broadcast %cst_28 : f32 to vector<32x1xf32>
    %53 = arith.mulf %39, %52 : vector<32x1xf32>
    %cst_29 = arith.constant 1.562500e-02 : f32
    %54 = vector.broadcast %cst_29 : f32 to vector<32x1xf32>
    %55 = arith.mulf %36, %54 : vector<32x1xf32>
    %cst_30 = arith.constant 1.562500e-02 : f32
    %56 = vector.broadcast %cst_30 : f32 to vector<32x1xf32>
    %57 = arith.mulf %39, %56 : vector<32x1xf32>
    %58 = arith.subf %55, %57 : vector<32x1xf32>
    %59 = vector.broadcast %58 : vector<32x1xf32> to vector<32x32xf32>
    %60 = vector.broadcast %5 : vector<1x32xf32> to vector<32x32xf32>
    %61 = arith.mulf %59, %60 : vector<32x32xf32>
    %62 = vector.broadcast %53 : vector<32x1xf32> to vector<32x32xf32>
    %63 = arith.addf %62, %61 : vector<32x32xf32>
    %64 = arith.mulf %51, %51 : vector<32x32xf32>
    %65 = arith.subf %63, %64 : vector<32x32xf32>
    %c0_31 = arith.constant 0 : index
    %c0_32 = arith.constant 0 : index
    %66 = vector.load %arg7[%c0_31, %c0_32] : memref<64x32xf32, #tpu.memory_space<vmem>>, vector<32x32xf32>
    %c32_33 = arith.constant 32 : index
    %c0_34 = arith.constant 0 : index
    %67 = vector.load %arg7[%c32_33, %c0_34] : memref<64x32xf32, #tpu.memory_space<vmem>>, vector<32x32xf32>
    %68 = arith.subf %22, %51 : vector<32x32xf32>
    %cst_35 = arith.constant 9.99999974E-6 : f32
    %69 = vector.broadcast %cst_35 : f32 to vector<32x32xf32>
    %70 = arith.addf %65, %69 : vector<32x32xf32>
    %71 = math.rsqrt %70 : vector<32x32xf32>
    %72 = arith.mulf %68, %71 : vector<32x32xf32>
    %73 = arith.mulf %72, %66 : vector<32x32xf32>
    %74 = arith.addf %73, %67 : vector<32x32xf32>
    %75 = arith.negf %74 : vector<32x32xf32>
    %76 = math.exp %75 : vector<32x32xf32>
    %cst_36 = arith.constant 1.000000e+00 : f32
    %77 = vector.broadcast %cst_36 : f32 to vector<32x32xf32>
    %78 = arith.addf %77, %76 : vector<32x32xf32>
    %79 = arith.divf %77, %78 : vector<32x32xf32>
    %c0_37 = arith.constant 0 : index
    %c0_38 = arith.constant 0 : index
    %80 = vector.load %arg4[%c0_37, %c0_38] : memref<32x512xf32, #tpu.memory_space<vmem>>, vector<32x512xf32>
    %cst_39 = arith.constant dense<0.000000e+00> : vector<32x512xf32>
    %81 = tpu.matmul %79, %80, %cst_39 {dimension_numbers = #tpu.dot_dimension_numbers<[1], [0], [0], [1], [0, 0, 1, 1], [], []>} : vector<32x32xf32>, vector<32x512xf32>, vector<32x512xf32> -> vector<32x512xf32>
    %82 = vector.extract_strided_slice %81 {offsets = [0, 0], sizes = [32, 256], strides = [1, 1]} : vector<32x512xf32> to vector<32x256xf32>
    %83 = arith.mulf %0, %82 : vector<32x256xf32>
    %84 = vector.extract_strided_slice %81 {offsets = [0, 256], sizes = [32, 256], strides = [1, 1]} : vector<32x512xf32> to vector<32x256xf32>
    %85 = arith.mulf %83, %84 : vector<32x256xf32>
    %c0_40 = arith.constant 0 : index
    %c0_41 = arith.constant 0 : index
    %86 = vector.load %arg5[%c0_40, %c0_41] : memref<256x16xf32, #tpu.memory_space<vmem>>, vector<256x16xf32>
    %cst_42 = arith.constant dense<0.000000e+00> : vector<32x16xf32>
    %87 = tpu.matmul %85, %86, %cst_42 {dimension_numbers = #tpu.dot_dimension_numbers<[1], [0], [0], [1], [0, 0, 1, 1], [], []>} : vector<32x256xf32>, vector<256x16xf32>, vector<32x16xf32> -> vector<32x16xf32>
    %88 = arith.mulf %87, %87 : vector<32x16xf32>
    %cst_43 = arith.constant dense<0.000000e+00> : vector<32x16xf32>
    %89 = tpu.matmul %13, %87, %cst_43 {dimension_numbers = #tpu.dot_dimension_numbers<[1], [0], [0], [1], [0, 0, 1, 1], [], []>} : vector<32x32xf32>, vector<32x16xf32>, vector<32x16xf32> -> vector<32x16xf32>
    %cst_44 = arith.constant dense<0.000000e+00> : vector<32x16xf32>
    %90 = tpu.matmul %13, %88, %cst_44 {dimension_numbers = #tpu.dot_dimension_numbers<[1], [0], [0], [1], [0, 0, 1, 1], [], []>} : vector<32x32xf32>, vector<32x16xf32>, vector<32x16xf32> -> vector<32x16xf32>
    %cst_45 = arith.constant dense<0.000000e+00> : vector<32xf32>
    %91 = vector.multi_reduction <add>, %89, %cst_45 [1] : vector<32x16xf32> to vector<32xf32>
    %92 = vector.shape_cast %91 : vector<32xf32> to vector<32x1xf32>
    %cst_46 = arith.constant 3.906250e-03 : f32
    %93 = vector.broadcast %cst_46 : f32 to vector<32x1xf32>
    %94 = arith.mulf %92, %93 : vector<32x1xf32>
    %cst_47 = arith.constant dense<0.000000e+00> : vector<32xf32>
    %95 = vector.multi_reduction <add>, %90, %cst_47 [1] : vector<32x16xf32> to vector<32xf32>
    %96 = vector.shape_cast %95 : vector<32xf32> to vector<32x1xf32>
    %cst_48 = arith.constant 3.906250e-03 : f32
    %97 = vector.broadcast %cst_48 : f32 to vector<32x1xf32>
    %98 = arith.mulf %96, %97 : vector<32x1xf32>
    %99 = arith.mulf %94, %94 : vector<32x1xf32>
    %100 = arith.subf %98, %99 : vector<32x1xf32>
    %101 = vector.broadcast %94 : vector<32x1xf32> to vector<32x16xf32>
    %102 = arith.subf %87, %101 : vector<32x16xf32>
    %cst_49 = arith.constant 9.99999974E-6 : f32
    %103 = vector.broadcast %cst_49 : f32 to vector<32x1xf32>
    %104 = arith.addf %100, %103 : vector<32x1xf32>
    %105 = math.rsqrt %104 : vector<32x1xf32>
    %106 = vector.broadcast %105 : vector<32x1xf32> to vector<32x16xf32>
    %107 = arith.mulf %102, %106 : vector<32x16xf32>
    %108 = vector.broadcast %7 : vector<32x1xf32> to vector<32x16xf32>
    %109 = arith.mulf %107, %108 : vector<32x16xf32>
    %110 = vector.broadcast %8 : vector<32x1xf32> to vector<32x16xf32>
    %111 = arith.addf %109, %110 : vector<32x16xf32>
    %112 = vector.broadcast %9 : vector<32x1xf32> to vector<32x16xf32>
    %113 = arith.mulf %111, %112 : vector<32x16xf32>
    %114 = vector.broadcast %10 : vector<32x1xf32> to vector<32x16xf32>
    %115 = arith.mulf %111, %114 : vector<32x16xf32>
    %116 = vector.broadcast %11 : vector<32x1xf32> to vector<32x16xf32>
    %117 = arith.mulf %111, %116 : vector<32x16xf32>
    %cst_50 = arith.constant dense<0.000000e+00> : vector<32x32xf32>
    %118 = tpu.matmul %113, %115, %cst_50 {dimension_numbers = #tpu.dot_dimension_numbers<[1], [1], [0], [0], [0, 0, 1, 0], [], []>} : vector<32x16xf32>, vector<32x16xf32>, vector<32x32xf32> -> vector<32x32xf32>
    %cst_51 = arith.constant 5.000000e-01 : f32
    %119 = vector.broadcast %cst_51 : f32 to vector<32x32xf32>
    %120 = arith.mulf %118, %119 : vector<32x32xf32>
    %121 = arith.addf %120, %14 : vector<32x32xf32>
    %cst_52 = arith.constant dense<0xFF800000> : vector<32xf32>
    %122 = vector.multi_reduction <maximumf>, %121, %cst_52 [1] : vector<32x32xf32> to vector<32xf32>
    %123 = vector.shape_cast %122 : vector<32xf32> to vector<32x1xf32>
    %124 = vector.broadcast %123 : vector<32x1xf32> to vector<32x32xf32>
    %125 = arith.subf %121, %124 : vector<32x32xf32>
    %126 = math.exp %125 : vector<32x32xf32>
    %cst_53 = arith.constant dense<0.000000e+00> : vector<32xf32>
    %127 = vector.multi_reduction <add>, %126, %cst_53 [1] : vector<32x32xf32> to vector<32xf32>
    %128 = vector.shape_cast %127 : vector<32xf32> to vector<32x1xf32>
    %129 = tpu.reciprocal %128 {approx = true} : vector<32x1xf32> -> vector<32x1xf32>
    %130 = vector.broadcast %129 : vector<32x1xf32> to vector<32x32xf32>
    %131 = arith.mulf %126, %130 : vector<32x32xf32>
    %cst_54 = arith.constant dense<0.000000e+00> : vector<32x16xf32>
    %132 = tpu.matmul %131, %117, %cst_54 {dimension_numbers = #tpu.dot_dimension_numbers<[1], [0], [0], [1], [0, 0, 1, 1], [], []>} : vector<32x32xf32>, vector<32x16xf32>, vector<32x16xf32> -> vector<32x16xf32>
    %cst_55 = arith.constant dense<0.000000e+00> : vector<32xf32>
    %133 = vector.multi_reduction <add>, %132, %cst_55 [1] : vector<32x16xf32> to vector<32xf32>
    %134 = vector.shape_cast %133 : vector<32xf32> to vector<32x1xf32>
    %cst_56 = arith.constant 6.250000e-02 : f32
    %135 = vector.broadcast %cst_56 : f32 to vector<32x1xf32>
    %136 = arith.mulf %134, %135 : vector<32x1xf32>
    %137 = arith.negf %136 : vector<32x1xf32>
    %138 = math.exp %137 : vector<32x1xf32>
    %cst_57 = arith.constant 1.000000e+00 : f32
    %139 = vector.broadcast %cst_57 : f32 to vector<32x1xf32>
    %140 = arith.addf %139, %138 : vector<32x1xf32>
    %141 = arith.divf %139, %140 : vector<32x1xf32>
    %142 = vector.broadcast %141 : vector<32x1xf32> to vector<32x256xf32>
    %143 = arith.mulf %142, %85 : vector<32x256xf32>
    %c0_58 = arith.constant 0 : index
    %c0_59 = arith.constant 0 : index
    %144 = vector.load %arg10[%c0_58, %c0_59] : memref<32x256xf32, #tpu.memory_space<vmem>>, vector<32x256xf32>
    tpu.vector_store %arg10[%c0_58, %c0_59], %143 {strides = array<i32>} : memref<32x256xf32, #tpu.memory_space<vmem>>, vector<32x256xf32>,
    return
  }
  func.func @transform_0(%arg0: i32) -> (i32, i32) {
    %c0_i32 = arith.constant 0 : i32
    %c0_i32_0 = arith.constant 0 : i32
    return %arg0, %c0_i32 : i32, i32
  }
  func.func @transform_1(%arg0: i32) -> (i32, i32) {
    %c0_i32 = arith.constant 0 : i32
    %c0_i32_0 = arith.constant 0 : i32
    %c0_i32_1 = arith.constant 0 : i32
    return %c0_i32, %c0_i32_0 : i32, i32
  }
  func.func @transform_2(%arg0: i32) -> (i32, i32) {
    %c0_i32 = arith.constant 0 : i32
    %c0_i32_0 = arith.constant 0 : i32
    %c0_i32_1 = arith.constant 0 : i32
    return %c0_i32, %c0_i32_0 : i32, i32
  }
  func.func @transform_3(%arg0: i32) -> (i32, i32) {
    %c0_i32 = arith.constant 0 : i32
    %c0_i32_0 = arith.constant 0 : i32
    %c0_i32_1 = arith.constant 0 : i32
    return %c0_i32, %c0_i32_0 : i32, i32
  }
  func.func @transform_4(%arg0: i32) -> (i32, i32) {
    %c0_i32 = arith.constant 0 : i32
    %c0_i32_0 = arith.constant 0 : i32
    %c0_i32_1 = arith.constant 0 : i32
    return %c0_i32, %c0_i32_0 : i32, i32
  }
  func.func @transform_5(%arg0: i32) -> (i32, i32) {
    %c0_i32 = arith.constant 0 : i32
    %c0_i32_0 = arith.constant 0 : i32
    %c0_i32_1 = arith.constant 0 : i32
    return %c0_i32, %c0_i32_0 : i32, i32
  }
  func.func @transform_6(%arg0: i32) -> (i32, i32) {
    %c0_i32 = arith.constant 0 : i32
    %c0_i32_0 = arith.constant 0 : i32
    %c0_i32_1 = arith.constant 0 : i32
    return %c0_i32, %c0_i32_0 : i32, i32
  }
  func.func @transform_7(%arg0: i32) -> (i32, i32) {
    %c0_i32 = arith.constant 0 : i32
    %c0_i32_0 = arith.constant 0 : i32
    %c0_i32_1 = arith.constant 0 : i32
    return %c0_i32, %c0_i32_0 : i32, i32
  }
  func.func @transform_8(%arg0: i32) -> (i32, i32) {
    %c0_i32 = arith.constant 0 : i32
    %c0_i32_0 = arith.constant 0 : i32
    %c0_i32_1 = arith.constant 0 : i32
    return %c0_i32, %c0_i32_0 : i32, i32
  }
  func.func @transform_9(%arg0: i32) -> (i32, i32) {
    %c0_i32 = arith.constant 0 : i32
    %c0_i32_0 = arith.constant 0 : i32
    return %arg0, %c0_i32 : i32, i32
  }
}

</mosaic_0001>

<llo_original>
// kernel: tpu_custom_call.1
$region0: #{tpu_custom_call.1}
  #allocation0 [shape = 'u32[]', space=smem, size = 0x4, offset = 0x4, fixed_abs, tag = 'smem constant byte address 0x4 - core index']
  #allocation1 [shape = 'u32[144,128]{1,0:T(1,128)}', space=vmem, size = 0x12000, scoped, tag = 'internal scratch']
  %s0 = inlined_call_operand.vmem [shape: f32[32,256], index: 0, kind: input, shape index: {}]
  %s1 = inlined_call_operand.vmem [shape: f32[256,288], index: 1, kind: input, shape index: {}]
  %s2 = inlined_call_operand.vmem [shape: f32[288,32], index: 2, kind: input, shape index: {}]
  %s3 = inlined_call_operand.vmem [shape: f32[32,512], index: 3, kind: input, shape index: {}]
  %s4 = inlined_call_operand.vmem [shape: f32[256,16], index: 4, kind: input, shape index: {}]
  %s5 = inlined_call_operand.vmem [shape: f32[32,288], index: 5, kind: input, shape index: {}]
  %s6 = inlined_call_operand.vmem [shape: f32[64,32], index: 6, kind: input, shape index: {}]
  %s7 = inlined_call_operand.vmem [shape: f32[32,8], index: 7, kind: input, shape index: {}]
  %s8 = inlined_call_operand.vmem [shape: f32[96,32], index: 8, kind: input, shape index: {}]
  %s9 = inlined_call_operand.hbm [shape: f32[32,256], index: 9, kind: output, shape index: {}]
  %s10 = sld [smem:[#allocation0]]
  $region46: #{tpu_custom_call.1} parent=0
    _
  %s12 = ssub.s32 1, %s10
  %s13 = scalar_select 0, %s12, %s10
  $region1: #{tpu_custom_call.1} parent=0
    #allocation2 [shape = 'u8[32768]{0}', space=vmem, size = 0x8000, scoped, tag = 'output window, operand 0, single buffered']
    #allocation3 [shape = 's32[1]{0}', space=sflag, size = 0x4, scoped, tag = 'scoped memory for tpu_custom_call.1']
    %14 = vsyncpa [#allocation3], 0
    // Predicated region
    $region2: #{tpu_custom_call.1} parent=1 // pred_check
      _
    $region3: #{tpu_custom_call.1} parent=1 // pred_check_branch
      %16 = sbr.rel (0) target = $region5
    $region4: #{tpu_custom_call.1} parent=1 // pred_region
      _
    $region5: #{tpu_custom_call.1} parent=1 // pred_fallthru
      _
    // Predicated region
    $region6: #{tpu_custom_call.1} parent=1 // pred_check
      _
    $region7: #{tpu_custom_call.1} parent=1 // pred_check_branch
      %18 = sbr.rel (0) target = $region9
    $region8: #{tpu_custom_call.1} parent=1 // pred_region
      _
    $region9: #{tpu_custom_call.1} parent=1 // pred_fallthru
      _
    // Predicated region
    $region10: #{tpu_custom_call.1} parent=1 // pred_check
      _
    $region11: #{tpu_custom_call.1} parent=1 // pred_check_branch
      %20 = sbr.rel (0) target = $region13
    $region12: #{tpu_custom_call.1} parent=1 // pred_region
      _
    $region13: #{tpu_custom_call.1} parent=1 // pred_fallthru
      _
    // Predicated region
    $region14: #{tpu_custom_call.1} parent=1 // pred_check
      _
    $region15: #{tpu_custom_call.1} parent=1 // pred_check_branch
      %22 = sbr.rel (0) target = $region17
    $region16: #{tpu_custom_call.1} parent=1 // pred_region
      _
    $region17: #{tpu_custom_call.1} parent=1 // pred_fallthru
      _
    // Predicated region
    $region18: #{tpu_custom_call.1} parent=1 // pred_check
      _
    $region19: #{tpu_custom_call.1} parent=1 // pred_check_branch
      %24 = sbr.rel (0) target = $region21
    $region20: #{tpu_custom_call.1} parent=1 // pred_region
      _
    $region21: #{tpu_custom_call.1} parent=1 // pred_fallthru
      _
    // Predicated region
    $region22: #{tpu_custom_call.1} parent=1 // pred_check
      _
    $region23: #{tpu_custom_call.1} parent=1 // pred_check_branch
      %26 = sbr.rel (0) target = $region25
    $region24: #{tpu_custom_call.1} parent=1 // pred_region
      _
    $region25: #{tpu_custom_call.1} parent=1 // pred_fallthru
      _
    // Predicated region
    $region26: #{tpu_custom_call.1} parent=1 // pred_check
      _
    $region27: #{tpu_custom_call.1} parent=1 // pred_check_branch
      %28 = sbr.rel (0) target = $region29
    $region28: #{tpu_custom_call.1} parent=1 // pred_region
      _
    $region29: #{tpu_custom_call.1} parent=1 // pred_fallthru
      _
    // Predicated region
    $region30: #{tpu_custom_call.1} parent=1 // pred_check
      _
    $region31: #{tpu_custom_call.1} parent=1 // pred_check_branch
      %30 = sbr.rel (0) target = $region33
    $region32: #{tpu_custom_call.1} parent=1 // pred_region
      _
    $region33: #{tpu_custom_call.1} parent=1 // pred_fallthru
      _
    // Predicated region
    $region34: #{tpu_custom_call.1} parent=1 // pred_check
      _
    $region35: #{tpu_custom_call.1} parent=1 // pred_check_branch
      %32 = sbr.rel (0) target = $region37
    $region36: #{tpu_custom_call.1} parent=1 // pred_region
      _
    $region37: #{tpu_custom_call.1} parent=1 // pred_fallthru
      _
    %v33 = vld [vmem:[%s0] sm:$0xff]
    %v34 = vld [vmem:[%s0 + $0x8] sm:$0xff]
    %v35 = vld [vmem:[%s0 + $0x10] sm:$0xff]
    %v36 = vld [vmem:[%s0 + $0x18] sm:$0xff]
    %v37 = vld [vmem:[%s0 + $0x20] sm:$0xff]
    %v38 = vld [vmem:[%s0 + $0x28] sm:$0xff]
    %v39 = vld [vmem:[%s0 + $0x30] sm:$0xff]
    %v40 = vld [vmem:[%s0 + $0x38] sm:$0xff]
    %v41 = vlaneseq
    %v42 = vand.u32 %v41, 127
    %vm43 = vcmp.lt.s32.totalorder %v42, 16
    %v44 = vsel %vm43, 1, 0
    %v45 = vcvt.s32.f32 %v44
    %v46 = vld [vmem:[%s7] sm:$0xff]
    %v47 = vld [vmem:[%s7 + $0x8] sm:$0xff]
    %v48 = vld [vmem:[%s7 + $0x10] sm:$0xff]
    %v49 = vld [vmem:[%s7 + $0x18] sm:$0xff]
    %v50 = vld [vmem:[%s8] sm:$0xff]
    %v51 = vld [vmem:[%s8 + $0x8] sm:$0xff]
    %v52 = vld [vmem:[%s8 + $0x10] sm:$0xff]
    %v53 = vld [vmem:[%s8 + $0x18] sm:$0xff]
    %v54 = vld [vmem:[%s8 + $0x20] sm:$0xff]
    %v55 = vld [vmem:[%s8 + $0x28] sm:$0xff]
    %v56 = vld [vmem:[%s8 + $0x30] sm:$0xff]
    %v57 = vld [vmem:[%s8 + $0x38] sm:$0xff]
    %v58 = vld [vmem:[%s8 + $0x40] sm:$0xff]
    %v59 = vld [vmem:[%s8 + $0x48] sm:$0xff]
    %v60 = vld [vmem:[%s8 + $0x50] sm:$0xff]
    %v61 = vld [vmem:[%s8 + $0x58] sm:$0xff]
    %v62 = vld [vmem:[%s1] sm:$0xff]
    %v63 = vld [vmem:[%s1 + $0x8] sm:$0xff]
    %v64 = vld [vmem:[%s1 + $0x10] sm:$0xff]
    %v65 = vld [vmem:[%s1 + $0x18] sm:$0xff]
    %v66 = vld [vmem:[%s1 + $0x20] sm:$0xff]
    %v67 = vld [vmem:[%s1 + $0x28] sm:$0xff]
    %v68 = vld [vmem:[%s1 + $0x30] sm:$0xff]
    %v69 = vld [vmem:[%s1 + $0x38] sm:$0xff]
    %v70 = vld [vmem:[%s1 + $0x40] sm:$0xff]
    %v71 = vld [vmem:[%s1 + $0x48] sm:$0xff]
    %v72 = vld [vmem:[%s1 + $0x50] sm:$0xff]
    %v73 = vld [vmem:[%s1 + $0x58] sm:$0xff]
    %v74 = vld [vmem:[%s1 + $0x60] sm:$0xff]
    %v75 = vld [vmem:[%s1 + $0x68] sm:$0xff]
    %v76 = vld [vmem:[%s1 + $0x70] sm:$0xff]
    %v77 = vld [vmem:[%s1 + $0x78] sm:$0xff]
    %v78 = vld [vmem:[%s1 + $0x80] sm:$0xff]
    %v79 = vld [vmem:[%s1 + $0x88] sm:$0xff]
    %v80 = vld [vmem:[%s1 + $0x90] sm:$0xff]
    %v81 = vld [vmem:[%s1 + $0x98] sm:$0xff]
    %v82 = vld [vmem:[%s1 + $0xa0] sm:$0xff]
    %v83 = vld [vmem:[%s1 + $0xa8] sm:$0xff]
    %v84 = vld [vmem:[%s1 + $0xb0] sm:$0xff]
    %v85 = vld [vmem:[%s1 + $0xb8] sm:$0xff]
    %v86 = vld [vmem:[%s1 + $0xc0] sm:$0xff]
    %v87 = vld [vmem:[%s1 + $0xc8] sm:$0xff]
    %v88 = vld [vmem:[%s1 + $0xd0] sm:$0xff]
    %v89 = vld [vmem:[%s1 + $0xd8] sm:$0xff]
    %v90 = vld [vmem:[%s1 + $0xe0] sm:$0xff]
    %v91 = vld [vmem:[%s1 + $0xe8] sm:$0xff]
    %v92 = vld [vmem:[%s1 + $0xf0] sm:$0xff]
    %v93 = vld [vmem:[%s1 + $0xf8] sm:$0xff]
    %v94 = vld [vmem:[%s1 + $0x100] sm:$0xff]
    %v95 = vld [vmem:[%s1 + $0x108] sm:$0xff]
    %v96 = vld [vmem:[%s1 + $0x110] sm:$0xff]
    %v97 = vld [vmem:[%s1 + $0x118] sm:$0xff]
    %v98 = vld [vmem:[%s1 + $0x120] sm:$0xff]
    %v99 = vld [vmem:[%s1 + $0x128] sm:$0xff]
    %v100 = vld [vmem:[%s1 + $0x130] sm:$0xff]
    %v101 = vld [vmem:[%s1 + $0x138] sm:$0xff]
    %v102 = vld [vmem:[%s1 + $0x140] sm:$0xff]
    %v103 = vld [vmem:[%s1 + $0x148] sm:$0xff]
    %v104 = vld [vmem:[%s1 + $0x150] sm:$0xff]
    %v105 = vld [vmem:[%s1 + $0x158] sm:$0xff]
    %v106 = vld [vmem:[%s1 + $0x160] sm:$0xff]
    %v107 = vld [vmem:[%s1 + $0x168] sm:$0xff]
    %v108 = vld [vmem:[%s1 + $0x170] sm:$0xff]
    %v109 = vld [vmem:[%s1 + $0x178] sm:$0xff]
    %v110 = vld [vmem:[%s1 + $0x180] sm:$0xff]
    %v111 = vld [vmem:[%s1 + $0x188] sm:$0xff]
    %v112 = vld [vmem:[%s1 + $0x190] sm:$0xff]
    %v113 = vld [vmem:[%s1 + $0x198] sm:$0xff]
    %v114 = vld [vmem:[%s1 + $0x1a0] sm:$0xff]
    %v115 = vld [vmem:[%s1 + $0x1a8] sm:$0xff]
    %v116 = vld [vmem:[%s1 + $0x1b0] sm:$0xff]
    %v117 = vld [vmem:[%s1 + $0x1b8] sm:$0xff]
    %v118 = vld [vmem:[%s1 + $0x1c0] sm:$0xff]
    %v119 = vld [vmem:[%s1 + $0x1c8] sm:$0xff]
    %v120 = vld [vmem:[%s1 + $0x1d0] sm:$0xff]
    %v121 = vld [vmem:[%s1 + $0x1d8] sm:$0xff]
    %v122 = vld [vmem:[%s1 + $0x1e0] sm:$0xff]
    %v123 = vld [vmem:[%s1 + $0x1e8] sm:$0xff]
    %v124 = vld [vmem:[%s1 + $0x1f0] sm:$0xff]
    %v125 = vld [vmem:[%s1 + $0x1f8] sm:$0xff]
    %v126 = vld [vmem:[%s1 + $0x200] sm:$0xff]
    %v127 = vld [vmem:[%s1 + $0x208] sm:$0xff]
    %v128 = vld [vmem:[%s1 + $0x210] sm:$0xff]
    %v129 = vld [vmem:[%s1 + $0x218] sm:$0xff]
    %v130 = vld [vmem:[%s1 + $0x220] sm:$0xff]
    %v131 = vld [vmem:[%s1 + $0x228] sm:$0xff]
    %v132 = vld [vmem:[%s1 + $0x230] sm:$0xff]
    %v133 = vld [vmem:[%s1 + $0x238] sm:$0xff]
    %v134 = vld [vmem:[%s1 + $0x240] sm:$0xff]
    %v135 = vld [vmem:[%s1 + $0x248] sm:$0xff]
    %v136 = vld [vmem:[%s1 + $0x250] sm:$0xff]
    %v137 = vld [vmem:[%s1 + $0x258] sm:$0xff]
    %v138 = vld [vmem:[%s1 + $0x260] sm:$0xff]
    %v139 = vld [vmem:[%s1 + $0x268] sm:$0xff]
    %v140 = vld [vmem:[%s1 + $0x270] sm:$0xff]
    %v141 = vld [vmem:[%s1 + $0x278] sm:$0xff]
    %v142 = vld [vmem:[%s1 + $0x280] sm:$0xff]
    %v143 = vld [vmem:[%s1 + $0x288] sm:$0xff]
    %v144 = vld [vmem:[%s1 + $0x290] sm:$0xff]
    %v145 = vld [vmem:[%s1 + $0x298] sm:$0xff]
    %v146 = vld [vmem:[%s1 + $0x2a0] sm:$0xff]
    %v147 = vld [vmem:[%s1 + $0x2a8] sm:$0xff]
    %v148 = vld [vmem:[%s1 + $0x2b0] sm:$0xff]
    %v149 = vld [vmem:[%s1 + $0x2b8] sm:$0xff]
    %v150 = vld [vmem:[%s1 + $0x2c0] sm:$0xff]
    %v151 = vld [vmem:[%s1 + $0x2c8] sm:$0xff]
    %v152 = vld [vmem:[%s1 + $0x2d0] sm:$0xff]
    %v153 = vld [vmem:[%s1 + $0x2d8] sm:$0xff]
    %v154 = vld [vmem:[%s1 + $0x2e0] sm:$0xff]
    %v155 = vld [vmem:[%s1 + $0x2e8] sm:$0xff]
    %v156 = vld [vmem:[%s1 + $0x2f0] sm:$0xff]
    %v157 = vld [vmem:[%s1 + $0x2f8] sm:$0xff]
    %158 = vmatprep.subr.mxu0 %v63
    %159 = vmatpush1.msra.mxu0 %v62
    %160 = vmatprep.subr.mxu0 %v66
    %161 = vmatpush1.msra.mxu0 %v65
    %162 = vmatprep.subr.mxu0 %v69
    %163 = vmatpush1.msra.mxu0 %v68
    %164 = vmatprep.subr.mxu0 %v72
    %165 = vmatpush1.msra.mxu0 %v71
    %166 = vmatprep.subr.mxu0 %v75
    %167 = vmatpush1.msra.mxu0 %v74
    %168 = vmatprep.subr.mxu0 %v78
    %169 = vmatpush1.msra.mxu0 %v77
    %170 = vmatprep.subr.mxu0 %v81
    %171 = vmatpush1.msra.mxu0 %v80
    %172 = vmatprep.subr.mxu0 %v84
    %173 = vmatpush1.msra.mxu0 %v83
    %174 = vmatprep.subr.mxu0 %v87
    %175 = vmatpush1.msra.mxu0 %v86
    %176 = vmatprep.subr.mxu0 %v90
    %177 = vmatpush1.msra.mxu0 %v89
    %178 = vmatprep.subr.mxu0 %v93
    %179 = vmatpush1.msra.mxu0 %v92
    %180 = vmatprep.subr.mxu0 %v96
    %181 = vmatpush1.msra.mxu0 %v95
    %182 = vmatprep.subr.mxu0 %v99
    %183 = vmatpush1.msra.mxu0 %v98
    %184 = vmatprep.subr.mxu0 %v102
    %185 = vmatpush1.msra.mxu0 %v101
    %186 = vmatprep.subr.mxu0 %v105
    %187 = vmatpush1.msra.mxu0 %v104
    %188 = vmatprep.subr.mxu0 %v108
    %189 = vmatpush1.msra.mxu0 %v107
    %190 = vmatprep.subr.mxu0 %v111
    %191 = vmatpush1.msra.mxu0 %v110
    %192 = vmatprep.subr.mxu0 %v114
    %193 = vmatpush1.msra.mxu0 %v113
    %194 = vmatprep.subr.mxu0 %v117
    %195 = vmatpush1.msra.mxu0 %v116
    %196 = vmatprep.subr.mxu0 %v120
    %197 = vmatpush1.msra.mxu0 %v119
    %198 = vmatprep.subr.mxu0 %v123
    %199 = vmatpush1.msra.mxu0 %v122
    %200 = vmatprep.subr.mxu0 %v126
    %201 = vmatpush1.msra.mxu0 %v125
    %202 = vmatprep.subr.mxu0 %v129
    %203 = vmatpush1.msra.mxu0 %v128
    %204 = vmatprep.subr.mxu0 %v132
    %205 = vmatpush1.msra.mxu0 %v131
    %206 = vmatprep.subr.mxu0 %v135
    %207 = vmatpush1.msra.mxu0 %v134
    %208 = vmatprep.subr.mxu0 %v138
    %209 = vmatpush1.msra.mxu0 %v137
    %210 = vmatprep.subr.mxu0 %v141
    %211 = vmatpush1.msra.mxu0 %v140
    %212 = vmatprep.subr.mxu0 %v144
    %213 = vmatpush1.msra.mxu0 %v143
    %214 = vmatprep.subr.mxu0 %v147
    %215 = vmatpush1.msra.mxu0 %v146
    %216 = vmatprep.subr.mxu0 %v150
    %217 = vmatpush1.msra.mxu0 %v149
    %218 = vmatprep.subr.mxu0 %v153
    %219 = vmatpush1.msra.mxu0 %v152
    %220 = vmatprep.subr.mxu0 %v156
    %221 = vmatpush1.msra.mxu0 %v155
    %222 = vmatprep.mubr.f32.mxu0 %v34
    %223 = vmatmul.mubr.f32.gmra.mrb[0].mxu0 %v33
    %v224 = vpop.f32.mrb[0].mxu0
    %v225 = vadd.f32 0.0, %v224
    %v226 = vpop.f32.mrb[0].mxu0
    %v227 = vadd.f32 0.0, %v226
    %228 = vmatprep.mubr.f32.mxu0 %v36
    %229 = vmatmul.mubr.f32.gmra.mrb[0].mxu0 %v35
    %v230 = vpop.f32.mrb[0].mxu0
    %v231 = vadd.f32 0.0, %v230
    %v232 = vpop.f32.mrb[0].mxu0
    %v233 = vadd.f32 0.0, %v232
    %234 = vmatprep.mubr.f32.mxu0 %v38
    %235 = vmatmul.mubr.f32.gmra.mrb[0].mxu0 %v37
    %v236 = vpop.f32.mrb[0].mxu0
    %v237 = vadd.f32 0.0, %v236
    %v238 = vpop.f32.mrb[0].mxu0
    %v239 = vadd.f32 0.0, %v238
    %240 = vmatprep.mubr.f32.mxu0 %v40
    %241 = vmatmul.mubr.f32.gmra.mrb[0].mxu0 %v39
    %v242 = vpop.f32.mrb[0].mxu0
    %v243 = vadd.f32 0.0, %v242
    %v244 = vpop.f32.mrb[0].mxu0
    %v245 = vadd.f32 0.0, %v244
    %246 = vdwg.mxu0
    %247 = vmatprep.subr.mxu0 0.0
    %248 = vmatpush1.msra.mxu0 %v64
    %249 = vmatprep.subr.mxu0 0.0
    %250 = vmatpush1.msra.mxu0 %v67
    %251 = vmatprep.subr.mxu0 0.0
    %252 = vmatpush1.msra.mxu0 %v70
    %253 = vmatprep.subr.mxu0 0.0
    %254 = vmatpush1.msra.mxu0 %v73
    %255 = vmatprep.subr.mxu0 0.0
    %256 = vmatpush1.msra.mxu0 %v76
    %257 = vmatprep.subr.mxu0 0.0
    %258 = vmatpush1.msra.mxu0 %v79
    %259 = vmatprep.subr.mxu0 0.0
    %260 = vmatpush1.msra.mxu0 %v82
    %261 = vmatprep.subr.mxu0 0.0
    %262 = vmatpush1.msra.mxu0 %v85
    %263 = vmatprep.subr.mxu0 0.0
    %264 = vmatpush1.msra.mxu0 %v88
    %265 = vmatprep.subr.mxu0 0.0
    %266 = vmatpush1.msra.mxu0 %v91
    %267 = vmatprep.subr.mxu0 0.0
    %268 = vmatpush1.msra.mxu0 %v94
    %269 = vmatprep.subr.mxu0 0.0
    %270 = vmatpush1.msra.mxu0 %v97
    %271 = vmatprep.subr.mxu0 0.0
    %272 = vmatpush1.msra.mxu0 %v100
    %273 = vmatprep.subr.mxu0 0.0
    %274 = vmatpush1.msra.mxu0 %v103
    %275 = vmatprep.subr.mxu0 0.0
    %276 = vmatpush1.msra.mxu0 %v106
    %277 = vmatprep.subr.mxu0 0.0
    %278 = vmatpush1.msra.mxu0 %v109
    %279 = vmatprep.subr.mxu0 0.0
    %280 = vmatpush1.msra.mxu0 %v112
    %281 = vmatprep.subr.mxu0 0.0
    %282 = vmatpush1.msra.mxu0 %v115
    %283 = vmatprep.subr.mxu0 0.0
    %284 = vmatpush1.msra.mxu0 %v118
    %285 = vmatprep.subr.mxu0 0.0
    %286 = vmatpush1.msra.mxu0 %v121
    %287 = vmatprep.subr.mxu0 0.0
    %288 = vmatpush1.msra.mxu0 %v124
    %289 = vmatprep.subr.mxu0 0.0
    %290 = vmatpush1.msra.mxu0 %v127
    %291 = vmatprep.subr.mxu0 0.0
    %292 = vmatpush1.msra.mxu0 %v130
    %293 = vmatprep.subr.mxu0 0.0
    %294 = vmatpush1.msra.mxu0 %v133
    %295 = vmatprep.subr.mxu0 0.0
    %296 = vmatpush1.msra.mxu0 %v136
    %297 = vmatprep.subr.mxu0 0.0
    %298 = vmatpush1.msra.mxu0 %v139
    %299 = vmatprep.subr.mxu0 0.0
    %300 = vmatpush1.msra.mxu0 %v142
    %301 = vmatprep.subr.mxu0 0.0
    %302 = vmatpush1.msra.mxu0 %v145
    %303 = vmatprep.subr.mxu0 0.0
    %304 = vmatpush1.msra.mxu0 %v148
    %305 = vmatprep.subr.mxu0 0.0
    %306 = vmatpush1.msra.mxu0 %v151
    %307 = vmatprep.subr.mxu0 0.0
    %308 = vmatpush1.msra.mxu0 %v154
    %309 = vmatprep.subr.mxu0 0.0
    %310 = vmatpush1.msra.mxu0 %v157
    %311 = vmatprep.mubr.f32.mxu0 %v34
    %312 = vmatmul.mubr.f32.gmra.mrb[0].mxu0 %v33
    %v313 = vpop.f32.mrb[0].mxu0
    %v314 = vadd.f32 0.0, %v313
    %v315 = vpop.f32.mrb[0].mxu0
    %316 = vmatprep.mubr.f32.mxu0 %v36
    %317 = vmatmul.mubr.f32.gmra.mrb[0].mxu0 %v35
    %v318 = vpop.f32.mrb[0].mxu0
    %v319 = vadd.f32 0.0, %v318
    %v320 = vpop.f32.mrb[0].mxu0
    %321 = vmatprep.mubr.f32.mxu0 %v38
    %322 = vmatmul.mubr.f32.gmra.mrb[0].mxu0 %v37
    %v323 = vpop.f32.mrb[0].mxu0
    %v324 = vadd.f32 0.0, %v323
    %v325 = vpop.f32.mrb[0].mxu0
    %326 = vmatprep.mubr.f32.mxu0 %v40
    %327 = vmatmul.mubr.f32.gmra.mrb[0].mxu0 %v39
    %v328 = vpop.f32.mrb[0].mxu0
    %v329 = vadd.f32 0.0, %v328
    %v330 = vpop.f32.mrb[0].mxu0
    %331 = vdwg.mxu0
    %v332 = vld [vmem:[%s5] sm:$0xff]
    %v333 = vld [vmem:[%s5 + $0x8] sm:$0xff]
    %v334 = vld [vmem:[%s5 + $0x10] sm:$0xff]
    %v335 = vld [vmem:[%s5 + $0x18] sm:$0xff]
    %v336 = vld [vmem:[%s5 + $0x20] sm:$0xff]
    %v337 = vld [vmem:[%s5 + $0x28] sm:$0xff]
    %v338 = vld [vmem:[%s5 + $0x30] sm:$0xff]
    %v339 = vld [vmem:[%s5 + $0x38] sm:$0xff]
    %v340 = vld [vmem:[%s5 + $0x40] sm:$0xff]
    %v341 = vld [vmem:[%s5 + $0x48] sm:$0xff]
    %v342 = vld [vmem:[%s5 + $0x50] sm:$0xff]
    %v343 = vld [vmem:[%s5 + $0x58] sm:$0xff]
    %v344 = vmul.f32 %v332, %v225
    %v345 = vmul.f32 %v333, %v227
    %v346 = vmul.f32 %v334, %v314
    %v347 = vmul.f32 %v335, %v231
    %v348 = vmul.f32 %v336, %v233
    %v349 = vmul.f32 %v337, %v319
    %v350 = vmul.f32 %v338, %v237
    %v351 = vmul.f32 %v339, %v239
    %v352 = vmul.f32 %v340, %v324
    %v353 = vmul.f32 %v341, %v243
    %v354 = vmul.f32 %v342, %v245
    %v355 = vmul.f32 %v343, %v329
    %v356 = vld [vmem:[%s2] sm:$0xff]
    %v357 = vld [vmem:[%s2 + $0x8] sm:$0xff]
    %v358 = vld [vmem:[%s2 + $0x10] sm:$0xff]
    %v359 = vld [vmem:[%s2 + $0x18] sm:$0xff]
    %v360 = vld [vmem:[%s2 + $0x20] sm:$0xff]
    %v361 = vld [vmem:[%s2 + $0x28] sm:$0xff]
    %v362 = vld [vmem:[%s2 + $0x30] sm:$0xff]
    %v363 = vld [vmem:[%s2 + $0x38] sm:$0xff]
    %v364 = vld [vmem:[%s2 + $0x40] sm:$0xff]
    %v365 = vld [vmem:[%s2 + $0x48] sm:$0xff]
    %v366 = vld [vmem:[%s2 + $0x50] sm:$0xff]
    %v367 = vld [vmem:[%s2 + $0x58] sm:$0xff]
    %v368 = vld [vmem:[%s2 + $0x60] sm:$0xff]
    %v369 = vld [vmem:[%s2 + $0x68] sm:$0xff]
    %v370 = vld [vmem:[%s2 + $0x70] sm:$0xff]
    %v371 = vld [vmem:[%s2 + $0x78] sm:$0xff]
    %v372 = vld [vmem:[%s2 + $0x80] sm:$0xff]
    %v373 = vld [vmem:[%s2 + $0x88] sm:$0xff]
    %v374 = vld [vmem:[%s2 + $0x90] sm:$0xff]
    %v375 = vld [vmem:[%s2 + $0x98] sm:$0xff]
    %v376 = vld [vmem:[%s2 + $0xa0] sm:$0xff]
    %v377 = vld [vmem:[%s2 + $0xa8] sm:$0xff]
    %v378 = vld [vmem:[%s2 + $0xb0] sm:$0xff]
    %v379 = vld [vmem:[%s2 + $0xb8] sm:$0xff]
    %v380 = vld [vmem:[%s2 + $0xc0] sm:$0xff]
    %v381 = vld [vmem:[%s2 + $0xc8] sm:$0xff]
    %v382 = vld [vmem:[%s2 + $0xd0] sm:$0xff]
    %v383 = vld [vmem:[%s2 + $0xd8] sm:$0xff]
    %v384 = vld [vmem:[%s2 + $0xe0] sm:$0xff]
    %v385 = vld [vmem:[%s2 + $0xe8] sm:$0xff]
    %v386 = vld [vmem:[%s2 + $0xf0] sm:$0xff]
    %v387 = vld [vmem:[%s2 + $0xf8] sm:$0xff]
    %v388 = vld [vmem:[%s2 + $0x100] sm:$0xff]
    %v389 = vld [vmem:[%s2 + $0x108] sm:$0xff]
    %v390 = vld [vmem:[%s2 + $0x110] sm:$0xff]
    %v391 = vld [vmem:[%s2 + $0x118] sm:$0xff]
    %393 = vset.pattern.permute.xlu0 0
    %394 = vperm.xlu0 %393, %v46
    %v395 = vpop.permute.xlu0 %394
    %398 = vset.pattern.permute.xlu0 0
    %399 = vperm.xlu0 %398, %v47
    %v400 = vpop.permute.xlu0 %399
    %403 = vset.pattern.permute.xlu0 0
    %404 = vperm.xlu0 %403, %v48
    %v405 = vpop.permute.xlu0 %404
    %408 = vset.pattern.permute.xlu0 0
    %409 = vperm.xlu0 %408, %v49
    %v410 = vpop.permute.xlu0 %409
    %vm412 = vcmask 261120
    %v414 = vsel %vm412, %v346, 0
    %v417 = vsel %vm412, %v349, 0
    %v420 = vsel %vm412, %v352, 0
    %v423 = vsel %vm412, %v355, 0
    %425 = vmatprep.subr.mxu0 0.0
    %426 = vmatpush1.msra.mxu0 %v356
    %427 = vmatprep.subr.mxu0 0.0
    %428 = vmatpush1.msra.mxu0 %v357
    %429 = vmatprep.subr.mxu0 0.0
    %430 = vmatpush1.msra.mxu0 %v358
    %431 = vmatprep.subr.mxu0 0.0
    %432 = vmatpush1.msra.mxu0 %v359
    %433 = vmatprep.subr.mxu0 0.0
    %434 = vmatpush1.msra.mxu0 %v360
    %435 = vmatprep.subr.mxu0 0.0
    %436 = vmatpush1.msra.mxu0 %v361
    %437 = vmatprep.subr.mxu0 0.0
    %438 = vmatpush1.msra.mxu0 %v362
    %439 = vmatprep.subr.mxu0 0.0
    %440 = vmatpush1.msra.mxu0 %v363
    %441 = vmatprep.subr.mxu0 0.0
    %442 = vmatpush1.msra.mxu0 %v364
    %443 = vmatprep.subr.mxu0 0.0
    %444 = vmatpush1.msra.mxu0 %v365
    %445 = vmatprep.subr.mxu0 0.0
    %446 = vmatpush1.msra.mxu0 %v366
    %447 = vmatprep.subr.mxu0 0.0
    %448 = vmatpush1.msra.mxu0 %v367
    %449 = vmatprep.subr.mxu0 0.0
    %450 = vmatpush1.msra.mxu0 %v368
    %451 = vmatprep.subr.mxu0 0.0
    %452 = vmatpush1.msra.mxu0 %v369
    %453 = vmatprep.subr.mxu0 0.0
    %454 = vmatpush1.msra.mxu0 %v370
    %455 = vmatprep.subr.mxu0 0.0
    %456 = vmatpush1.msra.mxu0 %v371
    %457 = vmatprep.subr.mxu0 0.0
    %458 = vmatpush1.msra.mxu0 %v372
    %459 = vmatprep.subr.mxu0 0.0
    %460 = vmatpush1.msra.mxu0 %v373
    %461 = vmatprep.subr.mxu0 0.0
    %462 = vmatpush1.msra.mxu0 %v374
    %463 = vmatprep.subr.mxu0 0.0
    %464 = vmatpush1.msra.mxu0 %v375
    %465 = vmatprep.subr.mxu0 0.0
    %466 = vmatpush1.msra.mxu0 %v376
    %467 = vmatprep.subr.mxu0 0.0
    %468 = vmatpush1.msra.mxu0 %v377
    %469 = vmatprep.subr.mxu0 0.0
    %470 = vmatpush1.msra.mxu0 %v378
    %471 = vmatprep.subr.mxu0 0.0
    %472 = vmatpush1.msra.mxu0 %v379
    %473 = vmatprep.subr.mxu0 0.0
    %474 = vmatpush1.msra.mxu0 %v380
    %475 = vmatprep.subr.mxu0 0.0
    %476 = vmatpush1.msra.mxu0 %v381
    %477 = vmatprep.subr.mxu0 0.0
    %478 = vmatpush1.msra.mxu0 %v382
    %479 = vmatprep.subr.mxu0 0.0
    %480 = vmatpush1.msra.mxu0 %v383
    %481 = vmatprep.subr.mxu0 0.0
    %482 = vmatpush1.msra.mxu0 %v384
    %483 = vmatprep.subr.mxu0 0.0
    %484 = vmatpush1.msra.mxu0 %v385
    %485 = vmatprep.subr.mxu0 0.0
    %486 = vmatpush1.msra.mxu0 %v386
    %487 = vmatprep.subr.mxu0 0.0
    %488 = vmatpush1.msra.mxu0 %v387
    %489 = vmatprep.mubr.f32.mxu0 %v345
    %490 = vmatmul.mubr.f32.gmra.mrb[0].mxu0 %v344
    %v491 = vpop.f32.mrb[0].mxu0
    %v492 = vadd.f32 %v395, %v491
    %v493 = vpop.f32.mrb[0].mxu0
    %494 = vmatprep.mubr.f32.mxu0 %v348
    %495 = vmatmul.mubr.f32.gmra.mrb[0].mxu0 %v347
    %v496 = vpop.f32.mrb[0].mxu0
    %v497 = vadd.f32 %v400, %v496
    %v498 = vpop.f32.mrb[0].mxu0
    %499 = vmatprep.mubr.f32.mxu0 %v351
    %500 = vmatmul.mubr.f32.gmra.mrb[0].mxu0 %v350
    %v501 = vpop.f32.mrb[0].mxu0
    %v502 = vadd.f32 %v405, %v501
    %v503 = vpop.f32.mrb[0].mxu0
    %504 = vmatprep.mubr.f32.mxu0 %v354
    %505 = vmatmul.mubr.f32.gmra.mrb[0].mxu0 %v353
    %v506 = vpop.f32.mrb[0].mxu0
    %v507 = vadd.f32 %v410, %v506
    %v508 = vpop.f32.mrb[0].mxu0
    %509 = vdwg.mxu0
    %510 = vmatprep.subr.mxu0 0.0
    %511 = vmatpush1.msra.mxu0 %v388
    %512 = vmatprep.subr.mxu0 0.0
    %513 = vmatpush1.msra.mxu0 %v389
    %514 = vmatprep.subr.mxu0 0.0
    %515 = vmatpush1.msra.mxu0 %v390
    %516 = vmatprep.subr.mxu0 0.0
    %517 = vmatpush1.msra.mxu0 %v391
    %518 = vmatprep.subr.mxu0 0.0
    %519 = vmatpush1.msra.mxu0 0.0
    %520 = vmatprep.subr.mxu0 0.0
    %521 = vmatpush1.msra.mxu0 0.0
    %522 = vmatprep.subr.mxu0 0.0
    %523 = vmatpush1.msra.mxu0 0.0
    %524 = vmatprep.subr.mxu0 0.0
    %525 = vmatpush1.msra.mxu0 0.0
    %526 = vmatprep.subr.mxu0 0.0
    %527 = vmatpush1.msra.mxu0 0.0
    %528 = vmatprep.subr.mxu0 0.0
    %529 = vmatpush1.msra.mxu0 0.0
    %530 = vmatprep.subr.mxu0 0.0
    %531 = vmatpush1.msra.mxu0 0.0
    %532 = vmatprep.subr.mxu0 0.0
    %533 = vmatpush1.msra.mxu0 0.0
    %534 = vmatprep.subr.mxu0 0.0
    %535 = vmatpush1.msra.mxu0 0.0
    %536 = vmatprep.subr.mxu0 0.0
    %537 = vmatpush1.msra.mxu0 0.0
    %538 = vmatprep.subr.mxu0 0.0
    %539 = vmatpush1.msra.mxu0 0.0
    %540 = vmatprep.subr.mxu0 0.0
    %541 = vmatpush1.msra.mxu0 0.0
    %542 = vmatprep.subr.mxu0 0.0
    %543 = vmatpush1.msra.mxu0 0.0
    %544 = vmatprep.subr.mxu0 0.0
    %545 = vmatpush1.msra.mxu0 0.0
    %546 = vmatprep.subr.mxu0 0.0
    %547 = vmatpush1.msra.mxu0 0.0
    %548 = vmatprep.subr.mxu0 0.0
    %549 = vmatpush1.msra.mxu0 0.0
    %550 = vmatprep.subr.mxu0 0.0
    %551 = vmatpush1.msra.mxu0 0.0
    %552 = vmatprep.subr.mxu0 0.0
    %553 = vmatpush1.msra.mxu0 0.0
    %554 = vmatprep.subr.mxu0 0.0
    %555 = vmatpush1.msra.mxu0 0.0
    %556 = vmatprep.subr.mxu0 0.0
    %557 = vmatpush1.msra.mxu0 0.0
    %558 = vmatprep.subr.mxu0 0.0
    %559 = vmatpush1.msra.mxu0 0.0
    %560 = vmatprep.subr.mxu0 0.0
    %561 = vmatpush1.msra.mxu0 0.0
    %562 = vmatprep.subr.mxu0 0.0
    %563 = vmatpush1.msra.mxu0 0.0
    %564 = vmatprep.subr.mxu0 0.0
    %565 = vmatpush1.msra.mxu0 0.0
    %566 = vmatprep.subr.mxu0 0.0
    %567 = vmatpush1.msra.mxu0 0.0
    %568 = vmatprep.subr.mxu0 0.0
    %569 = vmatpush1.msra.mxu0 0.0
    %570 = vmatprep.subr.mxu0 0.0
    %571 = vmatpush1.msra.mxu0 0.0
    %572 = vmatprep.subr.mxu0 0.0
    %573 = vmatpush1.msra.mxu0 0.0
    %574 = vmatprep.mubr.f32.mxu0 0.0
    %575 = vmatmul.mubr.f32.gmra.mrb[0].mxu0 %v414
    %v576 = vpop.f32.mrb[0].mxu0
    %v577 = vadd.f32 %v492, %v576
    %v578 = vpop.f32.mrb[0].mxu0
    %579 = vmatprep.mubr.f32.mxu0 0.0
    %580 = vmatmul.mubr.f32.gmra.mrb[0].mxu0 %v417
    %v581 = vpop.f32.mrb[0].mxu0
    %v582 = vadd.f32 %v497, %v581
    %v583 = vpop.f32.mrb[0].mxu0
    %584 = vmatprep.mubr.f32.mxu0 0.0
    %585 = vmatmul.mubr.f32.gmra.mrb[0].mxu0 %v420
    %v586 = vpop.f32.mrb[0].mxu0
    %v587 = vadd.f32 %v502, %v586
    %v588 = vpop.f32.mrb[0].mxu0
    %589 = vmatprep.mubr.f32.mxu0 0.0
    %590 = vmatmul.mubr.f32.gmra.mrb[0].mxu0 %v423
    %v591 = vpop.f32.mrb[0].mxu0
    %v592 = vadd.f32 %v507, %v591
    %v593 = vpop.f32.mrb[0].mxu0
    %594 = vdwg.mxu0
    %v595 = vmul.f32 %v577, %v577
    %v596 = vmul.f32 %v582, %v582
    %v597 = vmul.f32 %v587, %v587
    %v598 = vmul.f32 %v592, %v592
    %v600 = vsel %vm412, %v50, 0
    %v603 = vsel %vm412, %v51, 0
    %v606 = vsel %vm412, %v52, 0
    %v609 = vsel %vm412, %v53, 0
    %611 = vmatprep.subr.mxu0 0.0
    %612 = vmatpush1.msra.mxu0 %v577
    %613 = vmatprep.subr.mxu0 0.0
    %614 = vmatpush1.msra.mxu0 %v582
    %615 = vmatprep.subr.mxu0 0.0
    %616 = vmatpush1.msra.mxu0 %v587
    %617 = vmatprep.subr.mxu0 0.0
    %618 = vmatpush1.msra.mxu0 %v592
    %619 = vmatprep.subr.mxu0 0.0
    %620 = vmatpush1.msra.mxu0 0.0
    %621 = vmatprep.subr.mxu0 0.0
    %622 = vmatpush1.msra.mxu0 0.0
    %623 = vmatprep.subr.mxu0 0.0
    %624 = vmatpush1.msra.mxu0 0.0
    %625 = vmatprep.subr.mxu0 0.0
    %626 = vmatpush1.msra.mxu0 0.0
    %627 = vmatprep.subr.mxu0 0.0
    %628 = vmatpush1.msra.mxu0 0.0
    %629 = vmatprep.subr.mxu0 0.0
    %630 = vmatpush1.msra.mxu0 0.0
    %631 = vmatprep.subr.mxu0 0.0
    %632 = vmatpush1.msra.mxu0 0.0
    %633 = vmatprep.subr.mxu0 0.0
    %634 = vmatpush1.msra.mxu0 0.0
    %635 = vmatprep.subr.mxu0 0.0
    %636 = vmatpush1.msra.mxu0 0.0
    %637 = vmatprep.subr.mxu0 0.0
    %638 = vmatpush1.msra.mxu0 0.0
    %639 = vmatprep.subr.mxu0 0.0
    %640 = vmatpush1.msra.mxu0 0.0
    %641 = vmatprep.subr.mxu0 0.0
    %642 = vmatpush1.msra.mxu0 0.0
    %643 = vmatprep.subr.mxu0 0.0
    %644 = vmatpush1.msra.mxu0 0.0
    %645 = vmatprep.subr.mxu0 0.0
    %646 = vmatpush1.msra.mxu0 0.0
    %647 = vmatprep.subr.mxu0 0.0
    %648 = vmatpush1.msra.mxu0 0.0
    %649 = vmatprep.subr.mxu0 0.0
    %650 = vmatpush1.msra.mxu0 0.0
    %651 = vmatprep.subr.mxu0 0.0
    %652 = vmatpush1.msra.mxu0 0.0
    %653 = vmatprep.subr.mxu0 0.0
    %654 = vmatpush1.msra.mxu0 0.0
    %655 = vmatprep.subr.mxu0 0.0
    %656 = vmatpush1.msra.mxu0 0.0
    %657 = vmatprep.subr.mxu0 0.0
    %658 = vmatpush1.msra.mxu0 0.0
    %659 = vmatprep.subr.mxu0 0.0
    %660 = vmatpush1.msra.mxu0 0.0
    %661 = vmatprep.subr.mxu0 0.0
    %662 = vmatpush1.msra.mxu0 0.0
    %663 = vmatprep.subr.mxu0 0.0
    %664 = vmatpush1.msra.mxu0 0.0
    %665 = vmatprep.subr.mxu0 0.0
    %666 = vmatpush1.msra.mxu0 0.0
    %667 = vmatprep.subr.mxu0 0.0
    %668 = vmatpush1.msra.mxu0 0.0
    %669 = vmatprep.subr.mxu0 0.0
    %670 = vmatpush1.msra.mxu0 0.0
    %671 = vmatprep.subr.mxu0 0.0
    %672 = vmatpush1.msra.mxu0 0.0
    %673 = vmatprep.subr.mxu0 0.0
    %674 = vmatpush1.msra.mxu0 0.0
    %675 = vmatprep.mubr.f32.mxu0 0.0
    %676 = vmatmul.mubr.f32.gmra.mrb[0].mxu0 %v600
    %v677 = vpop.f32.mrb[0].mxu0
    %v678 = vadd.f32 0.0, %v677
    %v679 = vpop.f32.mrb[0].mxu0
    %680 = vmatprep.mubr.f32.mxu0 0.0
    %681 = vmatmul.mubr.f32.gmra.mrb[0].mxu0 %v603
    %v682 = vpop.f32.mrb[0].mxu0
    %v683 = vadd.f32 0.0, %v682
    %v684 = vpop.f32.mrb[0].mxu0
    %685 = vmatprep.mubr.f32.mxu0 0.0
    %686 = vmatmul.mubr.f32.gmra.mrb[0].mxu0 %v606
    %v687 = vpop.f32.mrb[0].mxu0
    %v688 = vadd.f32 0.0, %v687
    %v689 = vpop.f32.mrb[0].mxu0
    %690 = vmatprep.mubr.f32.mxu0 0.0
    %691 = vmatmul.mubr.f32.gmra.mrb[0].mxu0 %v609
    %v692 = vpop.f32.mrb[0].mxu0
    %v693 = vadd.f32 0.0, %v692
    %v694 = vpop.f32.mrb[0].mxu0
    %695 = vdwg.mxu0
    %696 = vmatprep.subr.mxu0 0.0
    %697 = vmatpush1.msra.mxu0 %v595
    %698 = vmatprep.subr.mxu0 0.0
    %699 = vmatpush1.msra.mxu0 %v596
    %700 = vmatprep.subr.mxu0 0.0
    %701 = vmatpush1.msra.mxu0 %v597
    %702 = vmatprep.subr.mxu0 0.0
    %703 = vmatpush1.msra.mxu0 %v598
    %704 = vmatprep.subr.mxu0 0.0
    %705 = vmatpush1.msra.mxu0 0.0
    %706 = vmatprep.subr.mxu0 0.0
    %707 = vmatpush1.msra.mxu0 0.0
    %708 = vmatprep.subr.mxu0 0.0
    %709 = vmatpush1.msra.mxu0 0.0
    %710 = vmatprep.subr.mxu0 0.0
    %711 = vmatpush1.msra.mxu0 0.0
    %712 = vmatprep.subr.mxu0 0.0
    %713 = vmatpush1.msra.mxu0 0.0
    %714 = vmatprep.subr.mxu0 0.0
    %715 = vmatpush1.msra.mxu0 0.0
    %716 = vmatprep.subr.mxu0 0.0
    %717 = vmatpush1.msra.mxu0 0.0
    %718 = vmatprep.subr.mxu0 0.0
    %719 = vmatpush1.msra.mxu0 0.0
    %720 = vmatprep.subr.mxu0 0.0
    %721 = vmatpush1.msra.mxu0 0.0
    %722 = vmatprep.subr.mxu0 0.0
    %723 = vmatpush1.msra.mxu0 0.0
    %724 = vmatprep.subr.mxu0 0.0
    %725 = vmatpush1.msra.mxu0 0.0
    %726 = vmatprep.subr.mxu0 0.0
    %727 = vmatpush1.msra.mxu0 0.0
    %728 = vmatprep.subr.mxu0 0.0
    %729 = vmatpush1.msra.mxu0 0.0
    %730 = vmatprep.subr.mxu0 0.0
    %731 = vmatpush1.msra.mxu0 0.0
    %732 = vmatprep.subr.mxu0 0.0
    %733 = vmatpush1.msra.mxu0 0.0
    %734 = vmatprep.subr.mxu0 0.0
    %735 = vmatpush1.msra.mxu0 0.0
    %736 = vmatprep.subr.mxu0 0.0
    %737 = vmatpush1.msra.mxu0 0.0
    %738 = vmatprep.subr.mxu0 0.0
    %739 = vmatpush1.msra.mxu0 0.0
    %740 = vmatprep.subr.mxu0 0.0
    %741 = vmatpush1.msra.mxu0 0.0
    %742 = vmatprep.subr.mxu0 0.0
    %743 = vmatpush1.msra.mxu0 0.0
    %744 = vmatprep.subr.mxu0 0.0
    %745 = vmatpush1.msra.mxu0 0.0
    %746 = vmatprep.subr.mxu0 0.0
    %747 = vmatpush1.msra.mxu0 0.0
    %748 = vmatprep.subr.mxu0 0.0
    %749 = vmatpush1.msra.mxu0 0.0
    %750 = vmatprep.subr.mxu0 0.0
    %751 = vmatpush1.msra.mxu0 0.0
    %752 = vmatprep.subr.mxu0 0.0
    %753 = vmatpush1.msra.mxu0 0.0
    %754 = vmatprep.subr.mxu0 0.0
    %755 = vmatpush1.msra.mxu0 0.0
    %756 = vmatprep.subr.mxu0 0.0
    %757 = vmatpush1.msra.mxu0 0.0
    %758 = vmatprep.subr.mxu0 0.0
    %759 = vmatpush1.msra.mxu0 0.0
    %760 = vmatprep.mubr.f32.mxu0 0.0
    %761 = vmatmul.mubr.f32.gmra.mrb[0].mxu0 %v600
    %v762 = vpop.f32.mrb[0].mxu0
    %v763 = vadd.f32 0.0, %v762
    %v764 = vpop.f32.mrb[0].mxu0
    %765 = vmatprep.mubr.f32.mxu0 0.0
    %766 = vmatmul.mubr.f32.gmra.mrb[0].mxu0 %v603
    %v767 = vpop.f32.mrb[0].mxu0
    %v768 = vadd.f32 0.0, %v767
    %v769 = vpop.f32.mrb[0].mxu0
    %770 = vmatprep.mubr.f32.mxu0 0.0
    %771 = vmatmul.mubr.f32.gmra.mrb[0].mxu0 %v606
    %v772 = vpop.f32.mrb[0].mxu0
    %v773 = vadd.f32 0.0, %v772
    %v774 = vpop.f32.mrb[0].mxu0
    %775 = vmatprep.mubr.f32.mxu0 0.0
    %776 = vmatmul.mubr.f32.gmra.mrb[0].mxu0 %v609
    %v777 = vpop.f32.mrb[0].mxu0
    %v778 = vadd.f32 0.0, %v777
    %v779 = vpop.f32.mrb[0].mxu0
    %780 = vdwg.mxu0
    %v781 = vmul.f32 %v678, %v45
    %v782 = vmul.f32 %v683, %v45
    %v783 = vmul.f32 %v688, %v45
    %v784 = vmul.f32 %v693, %v45
    %v785 = vsel %vm412, %v781, 0.0
    %786 = vadd.xlane.f32.xlu0 %v785
    %v787 = vpop.xlane.xlu0 %786
    %v788 = vsel %vm412, %v782, 0.0
    %789 = vadd.xlane.f32.xlu0 %v788
    %v790 = vpop.xlane.xlu0 %789
    %v791 = vsel %vm412, %v783, 0.0
    %792 = vadd.xlane.f32.xlu0 %v791
    %v793 = vpop.xlane.xlu0 %792
    %v794 = vsel %vm412, %v784, 0.0
    %795 = vadd.xlane.f32.xlu0 %v794
    %v796 = vpop.xlane.xlu0 %795
    %v797 = vsel %vm412, %v678, 0.0
    %798 = vadd.xlane.f32.xlu0 %v797
    %v799 = vpop.xlane.xlu0 %798
    %v800 = vsel %vm412, %v683, 0.0
    %801 = vadd.xlane.f32.xlu0 %v800
    %v802 = vpop.xlane.xlu0 %801
    %v803 = vsel %vm412, %v688, 0.0
    %804 = vadd.xlane.f32.xlu0 %v803
    %v805 = vpop.xlane.xlu0 %804
    %v806 = vsel %vm412, %v693, 0.0
    %807 = vadd.xlane.f32.xlu0 %v806
    %v808 = vpop.xlane.xlu0 %807
    %v809 = vsub.f32 %v799, %v787
    %v810 = vsub.f32 %v802, %v790
    %v811 = vsub.f32 %v805, %v793
    %v812 = vsub.f32 %v808, %v796
    %v813 = vmul.f32 %v763, %v45
    %v814 = vmul.f32 %v768, %v45
    %v815 = vmul.f32 %v773, %v45
    %v816 = vmul.f32 %v778, %v45
    %v817 = vsel %vm412, %v813, 0.0
    %818 = vadd.xlane.f32.xlu0 %v817
    %v819 = vpop.xlane.xlu0 %818
    %v820 = vsel %vm412, %v814, 0.0
    %821 = vadd.xlane.f32.xlu0 %v820
    %v822 = vpop.xlane.xlu0 %821
    %v823 = vsel %vm412, %v815, 0.0
    %824 = vadd.xlane.f32.xlu0 %v823
    %v825 = vpop.xlane.xlu0 %824
    %v826 = vsel %vm412, %v816, 0.0
    %827 = vadd.xlane.f32.xlu0 %v826
    %v828 = vpop.xlane.xlu0 %827
    %v829 = vsel %vm412, %v763, 0.0
    %830 = vadd.xlane.f32.xlu0 %v829
    %v831 = vpop.xlane.xlu0 %830
    %v832 = vsel %vm412, %v768, 0.0
    %833 = vadd.xlane.f32.xlu0 %v832
    %v834 = vpop.xlane.xlu0 %833
    %v835 = vsel %vm412, %v773, 0.0
    %836 = vadd.xlane.f32.xlu0 %v835
    %v837 = vpop.xlane.xlu0 %836
    %v838 = vsel %vm412, %v778, 0.0
    %839 = vadd.xlane.f32.xlu0 %v838
    %v840 = vpop.xlane.xlu0 %839
    %v841 = vsub.f32 %v831, %v819
    %v842 = vsub.f32 %v834, %v822
    %v843 = vsub.f32 %v837, %v825
    %v844 = vsub.f32 %v840, %v828
    %v845 = vmul.f32 %v809, 0.015625
    %v846 = vmul.f32 %v810, 0.015625
    %v847 = vmul.f32 %v811, 0.015625
    %v848 = vmul.f32 %v812, 0.015625
    %v849 = vmul.f32 %v787, 0.015625
    %v850 = vmul.f32 %v790, 0.015625
    %v851 = vmul.f32 %v793, 0.015625
    %v852 = vmul.f32 %v796, 0.015625
    %v853 = vsub.f32 %v849, %v845
    %v854 = vsub.f32 %v850, %v846
    %v855 = vsub.f32 %v851, %v847
    %v856 = vsub.f32 %v852, %v848
    %v857 = vmul.f32 %v853, %v45
    %v858 = vmul.f32 %v854, %v45
    %v859 = vmul.f32 %v855, %v45
    %v860 = vmul.f32 %v856, %v45
    %v861 = vadd.f32 %v845, %v857
    %v862 = vadd.f32 %v846, %v858
    %v863 = vadd.f32 %v847, %v859
    %v864 = vadd.f32 %v848, %v860
    %v865 = vmul.f32 %v841, 0.015625
    %v866 = vmul.f32 %v842, 0.015625
    %v867 = vmul.f32 %v843, 0.015625
    %v868 = vmul.f32 %v844, 0.015625
    %v869 = vmul.f32 %v819, 0.015625
    %v870 = vmul.f32 %v822, 0.015625
    %v871 = vmul.f32 %v825, 0.015625
    %v872 = vmul.f32 %v828, 0.015625
    %v873 = vsub.f32 %v869, %v865
    %v874 = vsub.f32 %v870, %v866
    %v875 = vsub.f32 %v871, %v867
    %v876 = vsub.f32 %v872, %v868
    %v877 = vmul.f32 %v873, %v45
    %v878 = vmul.f32 %v874, %v45
    %v879 = vmul.f32 %v875, %v45
    %v880 = vmul.f32 %v876, %v45
    %v881 = vadd.f32 %v865, %v877
    %v882 = vadd.f32 %v866, %v878
    %v883 = vadd.f32 %v867, %v879
    %v884 = vadd.f32 %v868, %v880
    %v885 = vmul.f32 %v861, %v861
    %v886 = vmul.f32 %v862, %v862
    %v887 = vmul.f32 %v863, %v863
    %v888 = vmul.f32 %v864, %v864
    %v889 = vsub.f32 %v881, %v885
    %v890 = vsub.f32 %v882, %v886
    %v891 = vsub.f32 %v883, %v887
    %v892 = vsub.f32 %v884, %v888
    %v893 = vld [vmem:[%s6] sm:$0xff]
    %v894 = vld [vmem:[%s6 + $0x8] sm:$0xff]
    %v895 = vld [vmem:[%s6 + $0x10] sm:$0xff]
    %v896 = vld [vmem:[%s6 + $0x18] sm:$0xff]
    %v897 = vld [vmem:[%s6 + $0x20] sm:$0xff]
    %v898 = vld [vmem:[%s6 + $0x28] sm:$0xff]
    %v899 = vld [vmem:[%s6 + $0x30] sm:$0xff]
    %v900 = vld [vmem:[%s6 + $0x38] sm:$0xff]
    %v901 = vsub.f32 %v577, %v861
    %v902 = vsub.f32 %v582, %v862
    %v903 = vsub.f32 %v587, %v863
    %v904 = vsub.f32 %v592, %v864
    %v905 = vadd.f32 %v889, 1e-05
    %v906 = vadd.f32 %v890, 1e-05
    %v907 = vadd.f32 %v891, 1e-05
    %v908 = vadd.f32 %v892, 1e-05
    %v909 = vrsqrt.pop %v905
    %v910 = vrsqrt.pop %v906
    %v911 = vrsqrt.pop %v907
    %v912 = vrsqrt.pop %v908
    %v913 = vmul.f32 %v901, %v909
    %v914 = vmul.f32 %v902, %v910
    %v915 = vmul.f32 %v903, %v911
    %v916 = vmul.f32 %v904, %v912
    %v917 = vmul.f32 %v913, %v893
    %v918 = vmul.f32 %v914, %v894
    %v919 = vmul.f32 %v915, %v895
    %v920 = vmul.f32 %v916, %v896
    %v921 = vadd.f32 %v917, %v897
    %v922 = vadd.f32 %v918, %v898
    %v923 = vadd.f32 %v919, %v899
    %v924 = vadd.f32 %v920, %v900
    %v925 = vxor.u32 %v921, 2147483648
    %v926 = vxor.u32 %v922, 2147483648
    %v927 = vxor.u32 %v923, 2147483648
    %v928 = vxor.u32 %v924, 2147483648
    %v929 = vmul.f32 %v925, 1.442695
    %v930 = vpow.pop %v929
    %v931 = vmul.f32 %v926, 1.442695
    %v932 = vpow.pop %v931
    %v933 = vmul.f32 %v927, 1.442695
    %v934 = vpow.pop %v933
    %v935 = vmul.f32 %v928, 1.442695
    %v936 = vpow.pop %v935
    %v937 = vadd.f32 %v930, 1.0
    %v938 = vadd.f32 %v932, 1.0
    %v939 = vadd.f32 %v934, 1.0
    %v940 = vadd.f32 %v936, 1.0
    %v941 = vrcp.pop %v937
    %v942 = vmul.f32 1.0, %v941
    %v943 = vrcp.pop %v938
    %v944 = vmul.f32 1.0, %v943
    %v945 = vrcp.pop %v939
    %v946 = vmul.f32 1.0, %v945
    %v947 = vrcp.pop %v940
    %v948 = vmul.f32 1.0, %v947
    %v949 = vld [vmem:[%s3] sm:$0xff]
    %v950 = vld [vmem:[%s3 + $0x8] sm:$0xff]
    %v951 = vld [vmem:[%s3 + $0x10] sm:$0xff]
    %v952 = vld [vmem:[%s3 + $0x18] sm:$0xff]
    %v953 = vld [vmem:[%s3 + $0x20] sm:$0xff]
    %v954 = vld [vmem:[%s3 + $0x28] sm:$0xff]
    %v955 = vld [vmem:[%s3 + $0x30] sm:$0xff]
    %v956 = vld [vmem:[%s3 + $0x38] sm:$0xff]
    %v957 = vld [vmem:[%s3 + $0x40] sm:$0xff]
    %v958 = vld [vmem:[%s3 + $0x48] sm:$0xff]
    %v959 = vld [vmem:[%s3 + $0x50] sm:$0xff]
    %v960 = vld [vmem:[%s3 + $0x58] sm:$0xff]
    %v961 = vld [vmem:[%s3 + $0x60] sm:$0xff]
    %v962 = vld [vmem:[%s3 + $0x68] sm:$0xff]
    %v963 = vld [vmem:[%s3 + $0x70] sm:$0xff]
    %v964 = vld [vmem:[%s3 + $0x78] sm:$0xff]
    %v966 = vsel %vm412, %v942, 0
    %v969 = vsel %vm412, %v944, 0
    %v972 = vsel %vm412, %v946, 0
    %v975 = vsel %vm412, %v948, 0
    %977 = vmatprep.subr.mxu0 %v950
    %978 = vmatpush1.msra.mxu0 %v949
    %979 = vmatprep.subr.mxu0 %v954
    %980 = vmatpush1.msra.mxu0 %v953
    %981 = vmatprep.subr.mxu0 %v958
    %982 = vmatpush1.msra.mxu0 %v957
    %983 = vmatprep.subr.mxu0 %v962
    %984 = vmatpush1.msra.mxu0 %v961
    %985 = vmatprep.subr.mxu0 0.0
    %986 = vmatpush1.msra.mxu0 0.0
    %987 = vmatprep.subr.mxu0 0.0
    %988 = vmatpush1.msra.mxu0 0.0
    %989 = vmatprep.subr.mxu0 0.0
    %990 = vmatpush1.msra.mxu0 0.0
    %991 = vmatprep.subr.mxu0 0.0
    %992 = vmatpush1.msra.mxu0 0.0
    %993 = vmatprep.subr.mxu0 0.0
    %994 = vmatpush1.msra.mxu0 0.0
    %995 = vmatprep.subr.mxu0 0.0
    %996 = vmatpush1.msra.mxu0 0.0
    %997 = vmatprep.subr.mxu0 0.0
    %998 = vmatpush1.msra.mxu0 0.0
    %999 = vmatprep.subr.mxu0 0.0
    %1000 = vmatpush1.msra.mxu0 0.0
    %1001 = vmatprep.subr.mxu0 0.0
    %1002 = vmatpush1.msra.mxu0 0.0
    %1003 = vmatprep.subr.mxu0 0.0
    %1004 = vmatpush1.msra.mxu0 0.0
    %1005 = vmatprep.subr.mxu0 0.0
    %1006 = vmatpush1.msra.mxu0 0.0
    %1007 = vmatprep.subr.mxu0 0.0
    %1008 = vmatpush1.msra.mxu0 0.0
    %1009 = vmatprep.subr.mxu0 0.0
    %1010 = vmatpush1.msra.mxu0 0.0
    %1011 = vmatprep.subr.mxu0 0.0
    %1012 = vmatpush1.msra.mxu0 0.0
    %1013 = vmatprep.subr.mxu0 0.0
    %1014 = vmatpush1.msra.mxu0 0.0
    %1015 = vmatprep.subr.mxu0 0.0
    %1016 = vmatpush1.msra.mxu0 0.0
    %1017 = vmatprep.subr.mxu0 0.0
    %1018 = vmatpush1.msra.mxu0 0.0
    %1019 = vmatprep.subr.mxu0 0.0
    %1020 = vmatpush1.msra.mxu0 0.0
    %1021 = vmatprep.subr.mxu0 0.0
    %1022 = vmatpush1.msra.mxu0 0.0
    %1023 = vmatprep.subr.mxu0 0.0
    %1024 = vmatpush1.msra.mxu0 0.0
    %1025 = vmatprep.subr.mxu0 0.0
    %1026 = vmatpush1.msra.mxu0 0.0
    %1027 = vmatprep.subr.mxu0 0.0
    %1028 = vmatpush1.msra.mxu0 0.0
    %1029 = vmatprep.subr.mxu0 0.0
    %1030 = vmatpush1.msra.mxu0 0.0
    %1031 = vmatprep.subr.mxu0 0.0
    %1032 = vmatpush1.msra.mxu0 0.0
    %1033 = vmatprep.subr.mxu0 0.0
    %1034 = vmatpush1.msra.mxu0 0.0
    %1035 = vmatprep.subr.mxu0 0.0
    %1036 = vmatpush1.msra.mxu0 0.0
    %1037 = vmatprep.subr.mxu0 0.0
    %1038 = vmatpush1.msra.mxu0 0.0
    %1039 = vmatprep.subr.mxu0 0.0
    %1040 = vmatpush1.msra.mxu0 0.0
    %1041 = vmatprep.mubr.f32.mxu0 0.0
    %1042 = vmatmul.mubr.f32.gmra.mrb[0].mxu0 %v966
    %v1043 = vpop.f32.mrb[0].mxu0
    %v1044 = vadd.f32 0.0, %v1043
    %v1045 = vpop.f32.mrb[0].mxu0
    %v1046 = vadd.f32 0.0, %v1045
    %1047 = vmatprep.mubr.f32.mxu0 0.0
    %1048 = vmatmul.mubr.f32.gmra.mrb[0].mxu0 %v969
    %v1049 = vpop.f32.mrb[0].mxu0
    %v1050 = vadd.f32 0.0, %v1049
    %v1051 = vpop.f32.mrb[0].mxu0
    %v1052 = vadd.f32 0.0, %v1051
    %1053 = vmatprep.mubr.f32.mxu0 0.0
    %1054 = vmatmul.mubr.f32.gmra.mrb[0].mxu0 %v972
    %v1055 = vpop.f32.mrb[0].mxu0
    %v1056 = vadd.f32 0.0, %v1055
    %v1057 = vpop.f32.mrb[0].mxu0
    %v1058 = vadd.f32 0.0, %v1057
    %1059 = vmatprep.mubr.f32.mxu0 0.0
    %1060 = vmatmul.mubr.f32.gmra.mrb[0].mxu0 %v975
    %v1061 = vpop.f32.mrb[0].mxu0
    %v1062 = vadd.f32 0.0, %v1061
    %v1063 = vpop.f32.mrb[0].mxu0
    %v1064 = vadd.f32 0.0, %v1063
    %1065 = vdwg.mxu0
    %1066 = vmatprep.subr.mxu0 %v952
    %1067 = vmatpush1.msra.mxu0 %v951
    %1068 = vmatprep.subr.mxu0 %v956
    %1069 = vmatpush1.msra.mxu0 %v955
    %1070 = vmatprep.subr.mxu0 %v960
    %1071 = vmatpush1.msra.mxu0 %v959
    %1072 = vmatprep.subr.mxu0 %v964
    %1073 = vmatpush1.msra.mxu0 %v963
    %1074 = vmatprep.subr.mxu0 0.0
    %1075 = vmatpush1.msra.mxu0 0.0
    %1076 = vmatprep.subr.mxu0 0.0
    %1077 = vmatpush1.msra.mxu0 0.0
    %1078 = vmatprep.subr.mxu0 0.0
    %1079 = vmatpush1.msra.mxu0 0.0
    %1080 = vmatprep.subr.mxu0 0.0
    %1081 = vmatpush1.msra.mxu0 0.0
    %1082 = vmatprep.subr.mxu0 0.0
    %1083 = vmatpush1.msra.mxu0 0.0
    %1084 = vmatprep.subr.mxu0 0.0
    %1085 = vmatpush1.msra.mxu0 0.0
    %1086 = vmatprep.subr.mxu0 0.0
    %1087 = vmatpush1.msra.mxu0 0.0
    %1088 = vmatprep.subr.mxu0 0.0
    %1089 = vmatpush1.msra.mxu0 0.0
    %1090 = vmatprep.subr.mxu0 0.0
    %1091 = vmatpush1.msra.mxu0 0.0
    %1092 = vmatprep.subr.mxu0 0.0
    %1093 = vmatpush1.msra.mxu0 0.0
    %1094 = vmatprep.subr.mxu0 0.0
    %1095 = vmatpush1.msra.mxu0 0.0
    %1096 = vmatprep.subr.mxu0 0.0
    %1097 = vmatpush1.msra.mxu0 0.0
    %1098 = vmatprep.subr.mxu0 0.0
    %1099 = vmatpush1.msra.mxu0 0.0
    %1100 = vmatprep.subr.mxu0 0.0
    %1101 = vmatpush1.msra.mxu0 0.0
    %1102 = vmatprep.subr.mxu0 0.0
    %1103 = vmatpush1.msra.mxu0 0.0
    %1104 = vmatprep.subr.mxu0 0.0
    %1105 = vmatpush1.msra.mxu0 0.0
    %1106 = vmatprep.subr.mxu0 0.0
    %1107 = vmatpush1.msra.mxu0 0.0
    %1108 = vmatprep.subr.mxu0 0.0
    %1109 = vmatpush1.msra.mxu0 0.0
    %1110 = vmatprep.subr.mxu0 0.0
    %1111 = vmatpush1.msra.mxu0 0.0
    %1112 = vmatprep.subr.mxu0 0.0
    %1113 = vmatpush1.msra.mxu0 0.0
    %1114 = vmatprep.subr.mxu0 0.0
    %1115 = vmatpush1.msra.mxu0 0.0
    %1116 = vmatprep.subr.mxu0 0.0
    %1117 = vmatpush1.msra.mxu0 0.0
    %1118 = vmatprep.subr.mxu0 0.0
    %1119 = vmatpush1.msra.mxu0 0.0
    %1120 = vmatprep.subr.mxu0 0.0
    %1121 = vmatpush1.msra.mxu0 0.0
    %1122 = vmatprep.subr.mxu0 0.0
    %1123 = vmatpush1.msra.mxu0 0.0
    %1124 = vmatprep.subr.mxu0 0.0
    %1125 = vmatpush1.msra.mxu0 0.0
    %1126 = vmatprep.subr.mxu0 0.0
    %1127 = vmatpush1.msra.mxu0 0.0
    %1128 = vmatprep.subr.mxu0 0.0
    %1129 = vmatpush1.msra.mxu0 0.0
    %1130 = vmatprep.mubr.f32.mxu0 0.0
    %1131 = vmatmul.mubr.f32.gmra.mrb[0].mxu0 %v966
    %v1132 = vpop.f32.mrb[0].mxu0
    %v1133 = vadd.f32 0.0, %v1132
    %v1134 = vpop.f32.mrb[0].mxu0
    %v1135 = vadd.f32 0.0, %v1134
    %1136 = vmatprep.mubr.f32.mxu0 0.0
    %1137 = vmatmul.mubr.f32.gmra.mrb[0].mxu0 %v969
    %v1138 = vpop.f32.mrb[0].mxu0
    %v1139 = vadd.f32 0.0, %v1138
    %v1140 = vpop.f32.mrb[0].mxu0
    %v1141 = vadd.f32 0.0, %v1140
    %1142 = vmatprep.mubr.f32.mxu0 0.0
    %1143 = vmatmul.mubr.f32.gmra.mrb[0].mxu0 %v972
    %v1144 = vpop.f32.mrb[0].mxu0
    %v1145 = vadd.f32 0.0, %v1144
    %v1146 = vpop.f32.mrb[0].mxu0
    %v1147 = vadd.f32 0.0, %v1146
    %1148 = vmatprep.mubr.f32.mxu0 0.0
    %1149 = vmatmul.mubr.f32.gmra.mrb[0].mxu0 %v975
    %v1150 = vpop.f32.mrb[0].mxu0
    %v1151 = vadd.f32 0.0, %v1150
    %v1152 = vpop.f32.mrb[0].mxu0
    %v1153 = vadd.f32 0.0, %v1152
    %1154 = vdwg.mxu0
    %v1155 = vmul.f32 %v33, %v1044
    %v1156 = vmul.f32 %v34, %v1046
    %v1157 = vmul.f32 %v35, %v1050
    %v1158 = vmul.f32 %v36, %v1052
    %v1159 = vmul.f32 %v37, %v1056
    %v1160 = vmul.f32 %v38, %v1058
    %v1161 = vmul.f32 %v39, %v1062
    %v1162 = vmul.f32 %v40, %v1064
    %v1163 = vmul.f32 %v1155, %v1133
    %v1164 = vmul.f32 %v1156, %v1135
    %v1165 = vmul.f32 %v1157, %v1139
    %v1166 = vmul.f32 %v1158, %v1141
    %v1167 = vmul.f32 %v1159, %v1145
    %v1168 = vmul.f32 %v1160, %v1147
    %v1169 = vmul.f32 %v1161, %v1151
    %v1170 = vmul.f32 %v1162, %v1153
    %v1171 = vld [vmem:[%s4] sm:$0xff]
    %v1172 = vld [vmem:[%s4 + $0x8] sm:$0xff]
    %v1173 = vld [vmem:[%s4 + $0x10] sm:$0xff]
    %v1174 = vld [vmem:[%s4 + $0x18] sm:$0xff]
    %v1175 = vld [vmem:[%s4 + $0x20] sm:$0xff]
    %v1176 = vld [vmem:[%s4 + $0x28] sm:$0xff]
    %v1177 = vld [vmem:[%s4 + $0x30] sm:$0xff]
    %v1178 = vld [vmem:[%s4 + $0x38] sm:$0xff]
    %v1179 = vld [vmem:[%s4 + $0x40] sm:$0xff]
    %v1180 = vld [vmem:[%s4 + $0x48] sm:$0xff]
    %v1181 = vld [vmem:[%s4 + $0x50] sm:$0xff]
    %v1182 = vld [vmem:[%s4 + $0x58] sm:$0xff]
    %v1183 = vld [vmem:[%s4 + $0x60] sm:$0xff]
    %v1184 = vld [vmem:[%s4 + $0x68] sm:$0xff]
    %v1185 = vld [vmem:[%s4 + $0x70] sm:$0xff]
    %v1186 = vld [vmem:[%s4 + $0x78] sm:$0xff]
    %v1187 = vld [vmem:[%s4 + $0x80] sm:$0xff]
    %v1188 = vld [vmem:[%s4 + $0x88] sm:$0xff]
    %v1189 = vld [vmem:[%s4 + $0x90] sm:$0xff]
    %v1190 = vld [vmem:[%s4 + $0x98] sm:$0xff]
    %v1191 = vld [vmem:[%s4 + $0xa0] sm:$0xff]
    %v1192 = vld [vmem:[%s4 + $0xa8] sm:$0xff]
    %v1193 = vld [vmem:[%s4 + $0xb0] sm:$0xff]
    %v1194 = vld [vmem:[%s4 + $0xb8] sm:$0xff]
    %v1195 = vld [vmem:[%s4 + $0xc0] sm:$0xff]
    %v1196 = vld [vmem:[%s4 + $0xc8] sm:$0xff]
    %v1197 = vld [vmem:[%s4 + $0xd0] sm:$0xff]
    %v1198 = vld [vmem:[%s4 + $0xd8] sm:$0xff]
    %v1199 = vld [vmem:[%s4 + $0xe0] sm:$0xff]
    %v1200 = vld [vmem:[%s4 + $0xe8] sm:$0xff]
    %v1201 = vld [vmem:[%s4 + $0xf0] sm:$0xff]
    %v1202 = vld [vmem:[%s4 + $0xf8] sm:$0xff]
    %1203 = vmatprep.subr.mxu0 0.0
    %1204 = vmatpush1.msra.mxu0 %v1171
    %1205 = vmatprep.subr.mxu0 0.0
    %1206 = vmatpush1.msra.mxu0 %v1172
    %1207 = vmatprep.subr.mxu0 0.0
    %1208 = vmatpush1.msra.mxu0 %v1173
    %1209 = vmatprep.subr.mxu0 0.0
    %1210 = vmatpush1.msra.mxu0 %v1174
    %1211 = vmatprep.subr.mxu0 0.0
    %1212 = vmatpush1.msra.mxu0 %v1175
    %1213 = vmatprep.subr.mxu0 0.0
    %1214 = vmatpush1.msra.mxu0 %v1176
    %1215 = vmatprep.subr.mxu0 0.0
    %1216 = vmatpush1.msra.mxu0 %v1177
    %1217 = vmatprep.subr.mxu0 0.0
    %1218 = vmatpush1.msra.mxu0 %v1178
    %1219 = vmatprep.subr.mxu0 0.0
    %1220 = vmatpush1.msra.mxu0 %v1179
    %1221 = vmatprep.subr.mxu0 0.0
    %1222 = vmatpush1.msra.mxu0 %v1180
    %1223 = vmatprep.subr.mxu0 0.0
    %1224 = vmatpush1.msra.mxu0 %v1181
    %1225 = vmatprep.subr.mxu0 0.0
    %1226 = vmatpush1.msra.mxu0 %v1182
    %1227 = vmatprep.subr.mxu0 0.0
    %1228 = vmatpush1.msra.mxu0 %v1183
    %1229 = vmatprep.subr.mxu0 0.0
    %1230 = vmatpush1.msra.mxu0 %v1184
    %1231 = vmatprep.subr.mxu0 0.0
    %1232 = vmatpush1.msra.mxu0 %v1185
    %1233 = vmatprep.subr.mxu0 0.0
    %1234 = vmatpush1.msra.mxu0 %v1186
    %1235 = vmatprep.subr.mxu0 0.0
    %1236 = vmatpush1.msra.mxu0 %v1187
    %1237 = vmatprep.subr.mxu0 0.0
    %1238 = vmatpush1.msra.mxu0 %v1188
    %1239 = vmatprep.subr.mxu0 0.0
    %1240 = vmatpush1.msra.mxu0 %v1189
    %1241 = vmatprep.subr.mxu0 0.0
    %1242 = vmatpush1.msra.mxu0 %v1190
    %1243 = vmatprep.subr.mxu0 0.0
    %1244 = vmatpush1.msra.mxu0 %v1191
    %1245 = vmatprep.subr.mxu0 0.0
    %1246 = vmatpush1.msra.mxu0 %v1192
    %1247 = vmatprep.subr.mxu0 0.0
    %1248 = vmatpush1.msra.mxu0 %v1193
    %1249 = vmatprep.subr.mxu0 0.0
    %1250 = vmatpush1.msra.mxu0 %v1194
    %1251 = vmatprep.subr.mxu0 0.0
    %1252 = vmatpush1.msra.mxu0 %v1195
    %1253 = vmatprep.subr.mxu0 0.0
    %1254 = vmatpush1.msra.mxu0 %v1196
    %1255 = vmatprep.subr.mxu0 0.0
    %1256 = vmatpush1.msra.mxu0 %v1197
    %1257 = vmatprep.subr.mxu0 0.0
    %1258 = vmatpush1.msra.mxu0 %v1198
    %1259 = vmatprep.subr.mxu0 0.0
    %1260 = vmatpush1.msra.mxu0 %v1199
    %1261 = vmatprep.subr.mxu0 0.0
    %1262 = vmatpush1.msra.mxu0 %v1200
    %1263 = vmatprep.subr.mxu0 0.0
    %1264 = vmatpush1.msra.mxu0 %v1201
    %1265 = vmatprep.subr.mxu0 0.0
    %1266 = vmatpush1.msra.mxu0 %v1202
    %1267 = vmatprep.mubr.f32.mxu0 %v1164
    %1268 = vmatmul.mubr.f32.gmra.mrb[0].mxu0 %v1163
    %v1269 = vpop.f32.mrb[0].mxu0
    %v1270 = vadd.f32 0.0, %v1269
    %v1271 = vpop.f32.mrb[0].mxu0
    %1272 = vmatprep.mubr.f32.mxu0 %v1166
    %1273 = vmatmul.mubr.f32.gmra.mrb[0].mxu0 %v1165
    %v1274 = vpop.f32.mrb[0].mxu0
    %v1275 = vadd.f32 0.0, %v1274
    %v1276 = vpop.f32.mrb[0].mxu0
    %1277 = vmatprep.mubr.f32.mxu0 %v1168
    %1278 = vmatmul.mubr.f32.gmra.mrb[0].mxu0 %v1167
    %v1279 = vpop.f32.mrb[0].mxu0
    %v1280 = vadd.f32 0.0, %v1279
    %v1281 = vpop.f32.mrb[0].mxu0
    %1282 = vmatprep.mubr.f32.mxu0 %v1170
    %1283 = vmatmul.mubr.f32.gmra.mrb[0].mxu0 %v1169
    %v1284 = vpop.f32.mrb[0].mxu0
    %v1285 = vadd.f32 0.0, %v1284
    %v1286 = vpop.f32.mrb[0].mxu0
    %1287 = vdwg.mxu0
    %v1288 = vmul.f32 %v1270, %v1270
    %v1289 = vmul.f32 %v1275, %v1275
    %v1290 = vmul.f32 %v1280, %v1280
    %v1291 = vmul.f32 %v1285, %v1285
    %v1293 = vsel %vm412, %v54, 0
    %v1296 = vsel %vm412, %v55, 0
    %v1299 = vsel %vm412, %v56, 0
    %v1302 = vsel %vm412, %v57, 0
    %1304 = vmatprep.subr.mxu0 0.0
    %1305 = vmatpush1.msra.mxu0 %v1270
    %1306 = vmatprep.subr.mxu0 0.0
    %1307 = vmatpush1.msra.mxu0 %v1275
    %1308 = vmatprep.subr.mxu0 0.0
    %1309 = vmatpush1.msra.mxu0 %v1280
    %1310 = vmatprep.subr.mxu0 0.0
    %1311 = vmatpush1.msra.mxu0 %v1285
    %1312 = vmatprep.subr.mxu0 0.0
    %1313 = vmatpush1.msra.mxu0 0.0
    %1314 = vmatprep.subr.mxu0 0.0
    %1315 = vmatpush1.msra.mxu0 0.0
    %1316 = vmatprep.subr.mxu0 0.0
    %1317 = vmatpush1.msra.mxu0 0.0
    %1318 = vmatprep.subr.mxu0 0.0
    %1319 = vmatpush1.msra.mxu0 0.0
    %1320 = vmatprep.subr.mxu0 0.0
    %1321 = vmatpush1.msra.mxu0 0.0
    %1322 = vmatprep.subr.mxu0 0.0
    %1323 = vmatpush1.msra.mxu0 0.0
    %1324 = vmatprep.subr.mxu0 0.0
    %1325 = vmatpush1.msra.mxu0 0.0
    %1326 = vmatprep.subr.mxu0 0.0
    %1327 = vmatpush1.msra.mxu0 0.0
    %1328 = vmatprep.subr.mxu0 0.0
    %1329 = vmatpush1.msra.mxu0 0.0
    %1330 = vmatprep.subr.mxu0 0.0
    %1331 = vmatpush1.msra.mxu0 0.0
    %1332 = vmatprep.subr.mxu0 0.0
    %1333 = vmatpush1.msra.mxu0 0.0
    %1334 = vmatprep.subr.mxu0 0.0
    %1335 = vmatpush1.msra.mxu0 0.0
    %1336 = vmatprep.subr.mxu0 0.0
    %1337 = vmatpush1.msra.mxu0 0.0
    %1338 = vmatprep.subr.mxu0 0.0
    %1339 = vmatpush1.msra.mxu0 0.0
    %1340 = vmatprep.subr.mxu0 0.0
    %1341 = vmatpush1.msra.mxu0 0.0
    %1342 = vmatprep.subr.mxu0 0.0
    %1343 = vmatpush1.msra.mxu0 0.0
    %1344 = vmatprep.subr.mxu0 0.0
    %1345 = vmatpush1.msra.mxu0 0.0
    %1346 = vmatprep.subr.mxu0 0.0
    %1347 = vmatpush1.msra.mxu0 0.0
    %1348 = vmatprep.subr.mxu0 0.0
    %1349 = vmatpush1.msra.mxu0 0.0
    %1350 = vmatprep.subr.mxu0 0.0
    %1351 = vmatpush1.msra.mxu0 0.0
    %1352 = vmatprep.subr.mxu0 0.0
    %1353 = vmatpush1.msra.mxu0 0.0
    %1354 = vmatprep.subr.mxu0 0.0
    %1355 = vmatpush1.msra.mxu0 0.0
    %1356 = vmatprep.subr.mxu0 0.0
    %1357 = vmatpush1.msra.mxu0 0.0
    %1358 = vmatprep.subr.mxu0 0.0
    %1359 = vmatpush1.msra.mxu0 0.0
    %1360 = vmatprep.subr.mxu0 0.0
    %1361 = vmatpush1.msra.mxu0 0.0
    %1362 = vmatprep.subr.mxu0 0.0
    %1363 = vmatpush1.msra.mxu0 0.0
    %1364 = vmatprep.subr.mxu0 0.0
    %1365 = vmatpush1.msra.mxu0 0.0
    %1366 = vmatprep.subr.mxu0 0.0
    %1367 = vmatpush1.msra.mxu0 0.0
    %1368 = vmatprep.mubr.f32.mxu0 0.0
    %1369 = vmatmul.mubr.f32.gmra.mrb[0].mxu0 %v1293
    %v1370 = vpop.f32.mrb[0].mxu0
    %v1371 = vadd.f32 0.0, %v1370
    %v1372 = vpop.f32.mrb[0].mxu0
    %1373 = vmatprep.mubr.f32.mxu0 0.0
    %1374 = vmatmul.mubr.f32.gmra.mrb[0].mxu0 %v1296
    %v1375 = vpop.f32.mrb[0].mxu0
    %v1376 = vadd.f32 0.0, %v1375
    %v1377 = vpop.f32.mrb[0].mxu0
    %1378 = vmatprep.mubr.f32.mxu0 0.0
    %1379 = vmatmul.mubr.f32.gmra.mrb[0].mxu0 %v1299
    %v1380 = vpop.f32.mrb[0].mxu0
    %v1381 = vadd.f32 0.0, %v1380
    %v1382 = vpop.f32.mrb[0].mxu0
    %1383 = vmatprep.mubr.f32.mxu0 0.0
    %1384 = vmatmul.mubr.f32.gmra.mrb[0].mxu0 %v1302
    %v1385 = vpop.f32.mrb[0].mxu0
    %v1386 = vadd.f32 0.0, %v1385
    %v1387 = vpop.f32.mrb[0].mxu0
    %1388 = vdwg.mxu0
    %1389 = vmatprep.subr.mxu0 0.0
    %1390 = vmatpush1.msra.mxu0 %v1288
    %1391 = vmatprep.subr.mxu0 0.0
    %1392 = vmatpush1.msra.mxu0 %v1289
    %1393 = vmatprep.subr.mxu0 0.0
    %1394 = vmatpush1.msra.mxu0 %v1290
    %1395 = vmatprep.subr.mxu0 0.0
    %1396 = vmatpush1.msra.mxu0 %v1291
    %1397 = vmatprep.subr.mxu0 0.0
    %1398 = vmatpush1.msra.mxu0 0.0
    %1399 = vmatprep.subr.mxu0 0.0
    %1400 = vmatpush1.msra.mxu0 0.0
    %1401 = vmatprep.subr.mxu0 0.0
    %1402 = vmatpush1.msra.mxu0 0.0
    %1403 = vmatprep.subr.mxu0 0.0
    %1404 = vmatpush1.msra.mxu0 0.0
    %1405 = vmatprep.subr.mxu0 0.0
    %1406 = vmatpush1.msra.mxu0 0.0
    %1407 = vmatprep.subr.mxu0 0.0
    %1408 = vmatpush1.msra.mxu0 0.0
    %1409 = vmatprep.subr.mxu0 0.0
    %1410 = vmatpush1.msra.mxu0 0.0
    %1411 = vmatprep.subr.mxu0 0.0
    %1412 = vmatpush1.msra.mxu0 0.0
    %1413 = vmatprep.subr.mxu0 0.0
    %1414 = vmatpush1.msra.mxu0 0.0
    %1415 = vmatprep.subr.mxu0 0.0
    %1416 = vmatpush1.msra.mxu0 0.0
    %1417 = vmatprep.subr.mxu0 0.0
    %1418 = vmatpush1.msra.mxu0 0.0
    %1419 = vmatprep.subr.mxu0 0.0
    %1420 = vmatpush1.msra.mxu0 0.0
    %1421 = vmatprep.subr.mxu0 0.0
    %1422 = vmatpush1.msra.mxu0 0.0
    %1423 = vmatprep.subr.mxu0 0.0
    %1424 = vmatpush1.msra.mxu0 0.0
    %1425 = vmatprep.subr.mxu0 0.0
    %1426 = vmatpush1.msra.mxu0 0.0
    %1427 = vmatprep.subr.mxu0 0.0
    %1428 = vmatpush1.msra.mxu0 0.0
    %1429 = vmatprep.subr.mxu0 0.0
    %1430 = vmatpush1.msra.mxu0 0.0
    %1431 = vmatprep.subr.mxu0 0.0
    %1432 = vmatpush1.msra.mxu0 0.0
    %1433 = vmatprep.subr.mxu0 0.0
    %1434 = vmatpush1.msra.mxu0 0.0
    %1435 = vmatprep.subr.mxu0 0.0
    %1436 = vmatpush1.msra.mxu0 0.0
    %1437 = vmatprep.subr.mxu0 0.0
    %1438 = vmatpush1.msra.mxu0 0.0
    %1439 = vmatprep.subr.mxu0 0.0
    %1440 = vmatpush1.msra.mxu0 0.0
    %1441 = vmatprep.subr.mxu0 0.0
    %1442 = vmatpush1.msra.mxu0 0.0
    %1443 = vmatprep.subr.mxu0 0.0
    %1444 = vmatpush1.msra.mxu0 0.0
    %1445 = vmatprep.subr.mxu0 0.0
    %1446 = vmatpush1.msra.mxu0 0.0
    %1447 = vmatprep.subr.mxu0 0.0
    %1448 = vmatpush1.msra.mxu0 0.0
    %1449 = vmatprep.subr.mxu0 0.0
    %1450 = vmatpush1.msra.mxu0 0.0
    %1451 = vmatprep.subr.mxu0 0.0
    %1452 = vmatpush1.msra.mxu0 0.0
    %1453 = vmatprep.mubr.f32.mxu0 0.0
    %1454 = vmatmul.mubr.f32.gmra.mrb[0].mxu0 %v1293
    %v1455 = vpop.f32.mrb[0].mxu0
    %v1456 = vadd.f32 0.0, %v1455
    %v1457 = vpop.f32.mrb[0].mxu0
    %1458 = vmatprep.mubr.f32.mxu0 0.0
    %1459 = vmatmul.mubr.f32.gmra.mrb[0].mxu0 %v1296
    %v1460 = vpop.f32.mrb[0].mxu0
    %v1461 = vadd.f32 0.0, %v1460
    %v1462 = vpop.f32.mrb[0].mxu0
    %1463 = vmatprep.mubr.f32.mxu0 0.0
    %1464 = vmatmul.mubr.f32.gmra.mrb[0].mxu0 %v1299
    %v1465 = vpop.f32.mrb[0].mxu0
    %v1466 = vadd.f32 0.0, %v1465
    %v1467 = vpop.f32.mrb[0].mxu0
    %1468 = vmatprep.mubr.f32.mxu0 0.0
    %1469 = vmatmul.mubr.f32.gmra.mrb[0].mxu0 %v1302
    %v1470 = vpop.f32.mrb[0].mxu0
    %v1471 = vadd.f32 0.0, %v1470
    %v1472 = vpop.f32.mrb[0].mxu0
    %1473 = vdwg.mxu0
    %vm1474 = vcmask 130048
    %v1475 = vsel %vm1474, %v1371, 0.0
    %1476 = vadd.xlane.f32.xlu0 %v1475
    %v1477 = vpop.xlane.xlu0 %1476
    %v1478 = vsel %vm1474, %v1376, 0.0
    %1479 = vadd.xlane.f32.xlu0 %v1478
    %v1480 = vpop.xlane.xlu0 %1479
    %v1481 = vsel %vm1474, %v1381, 0.0
    %1482 = vadd.xlane.f32.xlu0 %v1481
    %v1483 = vpop.xlane.xlu0 %1482
    %v1484 = vsel %vm1474, %v1386, 0.0
    %1485 = vadd.xlane.f32.xlu0 %v1484
    %v1486 = vpop.xlane.xlu0 %1485
    %v1487 = vmul.f32 %v1477, 0.00390625
    %v1488 = vmul.f32 %v1480, 0.00390625
    %v1489 = vmul.f32 %v1483, 0.00390625
    %v1490 = vmul.f32 %v1486, 0.00390625
    %v1491 = vsel %vm1474, %v1456, 0.0
    %1492 = vadd.xlane.f32.xlu0 %v1491
    %v1493 = vpop.xlane.xlu0 %1492
    %v1494 = vsel %vm1474, %v1461, 0.0
    %1495 = vadd.xlane.f32.xlu0 %v1494
    %v1496 = vpop.xlane.xlu0 %1495
    %v1497 = vsel %vm1474, %v1466, 0.0
    %1498 = vadd.xlane.f32.xlu0 %v1497
    %v1499 = vpop.xlane.xlu0 %1498
    %v1500 = vsel %vm1474, %v1471, 0.0
    %1501 = vadd.xlane.f32.xlu0 %v1500
    %v1502 = vpop.xlane.xlu0 %1501
    %v1503 = vmul.f32 %v1493, 0.00390625
    %v1504 = vmul.f32 %v1496, 0.00390625
    %v1505 = vmul.f32 %v1499, 0.00390625
    %v1506 = vmul.f32 %v1502, 0.00390625
    %v1507 = vmul.f32 %v1487, %v1487
    %v1508 = vmul.f32 %v1488, %v1488
    %v1509 = vmul.f32 %v1489, %v1489
    %v1510 = vmul.f32 %v1490, %v1490
    %v1511 = vsub.f32 %v1503, %v1507
    %v1512 = vsub.f32 %v1504, %v1508
    %v1513 = vsub.f32 %v1505, %v1509
    %v1514 = vsub.f32 %v1506, %v1510
    %v1515 = vsub.f32 %v1270, %v1487
    %v1516 = vsub.f32 %v1275, %v1488
    %v1517 = vsub.f32 %v1280, %v1489
    %v1518 = vsub.f32 %v1285, %v1490
    %v1519 = vadd.f32 %v1511, 1e-05
    %v1520 = vadd.f32 %v1512, 1e-05
    %v1521 = vadd.f32 %v1513, 1e-05
    %v1522 = vadd.f32 %v1514, 1e-05
    %v1523 = vrsqrt.pop %v1519
    %v1524 = vrsqrt.pop %v1520
    %v1525 = vrsqrt.pop %v1521
    %v1526 = vrsqrt.pop %v1522
    %v1527 = vmul.f32 %v1515, %v1523
    %v1528 = vmul.f32 %v1516, %v1524
    %v1529 = vmul.f32 %v1517, %v1525
    %v1530 = vmul.f32 %v1518, %v1526
    %1531 = vset.pattern.permute.xlu0 1
    %1532 = vperm.xlu0 %1531, %v46
    %v1533 = vpop.permute.xlu0 %1532
    %1535 = vset.pattern.permute.xlu0 1
    %1536 = vperm.xlu0 %1535, %v47
    %v1537 = vpop.permute.xlu0 %1536
    %1539 = vset.pattern.permute.xlu0 1
    %1540 = vperm.xlu0 %1539, %v48
    %v1541 = vpop.permute.xlu0 %1540
    %1543 = vset.pattern.permute.xlu0 1
    %1544 = vperm.xlu0 %1543, %v49
    %v1545 = vpop.permute.xlu0 %1544
    %v1547 = vmul.f32 %v1527, %v1533
    %v1548 = vmul.f32 %v1528, %v1537
    %v1549 = vmul.f32 %v1529, %v1541
    %v1550 = vmul.f32 %v1530, %v1545
    %1551 = vset.pattern.permute.xlu0 2
    %1552 = vperm.xlu0 %1551, %v46
    %v1553 = vpop.permute.xlu0 %1552
    %1555 = vset.pattern.permute.xlu0 2
    %1556 = vperm.xlu0 %1555, %v47
    %v1557 = vpop.permute.xlu0 %1556
    %1559 = vset.pattern.permute.xlu0 2
    %1560 = vperm.xlu0 %1559, %v48
    %v1561 = vpop.permute.xlu0 %1560
    %1563 = vset.pattern.permute.xlu0 2
    %1564 = vperm.xlu0 %1563, %v49
    %v1565 = vpop.permute.xlu0 %1564
    %v1567 = vadd.f32 %v1547, %v1553
    %v1568 = vadd.f32 %v1548, %v1557
    %v1569 = vadd.f32 %v1549, %v1561
    %v1570 = vadd.f32 %v1550, %v1565
    %1571 = vset.pattern.permute.xlu0 3
    %1572 = vperm.xlu0 %1571, %v46
    %v1573 = vpop.permute.xlu0 %1572
    %1575 = vset.pattern.permute.xlu0 3
    %1576 = vperm.xlu0 %1575, %v47
    %v1577 = vpop.permute.xlu0 %1576
    %1579 = vset.pattern.permute.xlu0 3
    %1580 = vperm.xlu0 %1579, %v48
    %v1581 = vpop.permute.xlu0 %1580
    %1583 = vset.pattern.permute.xlu0 3
    %1584 = vperm.xlu0 %1583, %v49
    %v1585 = vpop.permute.xlu0 %1584
    %v1587 = vmul.f32 %v1567, %v1573
    %v1588 = vmul.f32 %v1568, %v1577
    %v1589 = vmul.f32 %v1569, %v1581
    %v1590 = vmul.f32 %v1570, %v1585
    %1591 = vset.pattern.permute.xlu0 4
    %1592 = vperm.xlu0 %1591, %v46
    %v1593 = vpop.permute.xlu0 %1592
    %1595 = vset.pattern.permute.xlu0 4
    %1596 = vperm.xlu0 %1595, %v47
    %v1597 = vpop.permute.xlu0 %1596
    %1599 = vset.pattern.permute.xlu0 4
    %1600 = vperm.xlu0 %1599, %v48
    %v1601 = vpop.permute.xlu0 %1600
    %1603 = vset.pattern.permute.xlu0 4
    %1604 = vperm.xlu0 %1603, %v49
    %v1605 = vpop.permute.xlu0 %1604
    %v1607 = vmul.f32 %v1567, %v1593
    %v1608 = vmul.f32 %v1568, %v1597
    %v1609 = vmul.f32 %v1569, %v1601
    %v1610 = vmul.f32 %v1570, %v1605
    %1611 = vset.pattern.permute.xlu0 5
    %1612 = vperm.xlu0 %1611, %v46
    %v1613 = vpop.permute.xlu0 %1612
    %1615 = vset.pattern.permute.xlu0 5
    %1616 = vperm.xlu0 %1615, %v47
    %v1617 = vpop.permute.xlu0 %1616
    %1619 = vset.pattern.permute.xlu0 5
    %1620 = vperm.xlu0 %1619, %v48
    %v1621 = vpop.permute.xlu0 %1620
    %1623 = vset.pattern.permute.xlu0 5
    %1624 = vperm.xlu0 %1623, %v49
    %v1625 = vpop.permute.xlu0 %1624
    %v1627 = vmul.f32 %v1567, %v1613
    %v1628 = vmul.f32 %v1568, %v1617
    %v1629 = vmul.f32 %v1569, %v1621
    %v1630 = vmul.f32 %v1570, %v1625
    %v1632 = vsel %vm1474, %v1587, 0
    %v1635 = vsel %vm1474, %v1588, 0
    %v1638 = vsel %vm1474, %v1589, 0
    %v1641 = vsel %vm1474, %v1590, 0
    %v1644 = vsel %vm1474, %v1607, 0
    %v1647 = vsel %vm1474, %v1608, 0
    %v1650 = vsel %vm1474, %v1609, 0
    %v1653 = vsel %vm1474, %v1610, 0
    %1655 = vmatprep.subr.mxu0 0.0
    %1656 = vmatpush1.xpose.msra.mxu0 %v1644
    %1657 = vmatprep.subr.mxu0 0.0
    %1658 = vmatpush1.xpose.msra.mxu0 %v1647
    %1659 = vmatprep.subr.mxu0 0.0
    %1660 = vmatpush1.xpose.msra.mxu0 %v1650
    %1661 = vmatprep.subr.mxu0 0.0
    %1662 = vmatpush1.xpose.msra.mxu0 %v1653
    %1663 = vmatprep.subr.mxu0 0.0
    %1664 = vmatpush1.xpose.msra.mxu0 0.0
    %1665 = vmatprep.subr.mxu0 0.0
    %1666 = vmatpush1.xpose.msra.mxu0 0.0
    %1667 = vmatprep.subr.mxu0 0.0
    %1668 = vmatpush1.xpose.msra.mxu0 0.0
    %1669 = vmatprep.subr.mxu0 0.0
    %1670 = vmatpush1.xpose.msra.mxu0 0.0
    %1671 = vmatprep.subr.mxu0 0.0
    %1672 = vmatpush1.xpose.msra.mxu0 0.0
    %1673 = vmatprep.subr.mxu0 0.0
    %1674 = vmatpush1.xpose.msra.mxu0 0.0
    %1675 = vmatprep.subr.mxu0 0.0
    %1676 = vmatpush1.xpose.msra.mxu0 0.0
    %1677 = vmatprep.subr.mxu0 0.0
    %1678 = vmatpush1.xpose.msra.mxu0 0.0
    %1679 = vmatprep.subr.mxu0 0.0
    %1680 = vmatpush1.xpose.msra.mxu0 0.0
    %1681 = vmatprep.subr.mxu0 0.0
    %1682 = vmatpush1.xpose.msra.mxu0 0.0
    %1683 = vmatprep.subr.mxu0 0.0
    %1684 = vmatpush1.xpose.msra.mxu0 0.0
    %1685 = vmatprep.subr.mxu0 0.0
    %1686 = vmatpush1.xpose.msra.mxu0 0.0
    %1687 = vmatprep.subr.mxu0 0.0
    %1688 = vmatpush1.xpose.msra.mxu0 0.0
    %1689 = vmatprep.subr.mxu0 0.0
    %1690 = vmatpush1.xpose.msra.mxu0 0.0
    %1691 = vmatprep.subr.mxu0 0.0
    %1692 = vmatpush1.xpose.msra.mxu0 0.0
    %1693 = vmatprep.subr.mxu0 0.0
    %1694 = vmatpush1.xpose.msra.mxu0 0.0
    %1695 = vmatprep.subr.mxu0 0.0
    %1696 = vmatpush1.xpose.msra.mxu0 0.0
    %1697 = vmatprep.subr.mxu0 0.0
    %1698 = vmatpush1.xpose.msra.mxu0 0.0
    %1699 = vmatprep.subr.mxu0 0.0
    %1700 = vmatpush1.xpose.msra.mxu0 0.0
    %1701 = vmatprep.subr.mxu0 0.0
    %1702 = vmatpush1.xpose.msra.mxu0 0.0
    %1703 = vmatprep.subr.mxu0 0.0
    %1704 = vmatpush1.xpose.msra.mxu0 0.0
    %1705 = vmatprep.subr.mxu0 0.0
    %1706 = vmatpush1.xpose.msra.mxu0 0.0
    %1707 = vmatprep.subr.mxu0 0.0
    %1708 = vmatpush1.xpose.msra.mxu0 0.0
    %1709 = vmatprep.subr.mxu0 0.0
    %1710 = vmatpush1.xpose.msra.mxu0 0.0
    %1711 = vmatprep.subr.mxu0 0.0
    %1712 = vmatpush1.xpose.msra.mxu0 0.0
    %1713 = vmatprep.subr.mxu0 0.0
    %1714 = vmatpush1.xpose.msra.mxu0 0.0
    %1715 = vmatprep.subr.mxu0 0.0
    %1716 = vmatpush1.xpose.msra.mxu0 0.0
    %1717 = vmatprep.subr.mxu0 0.0
    %1718 = vmatpush1.xpose.msra.mxu0 0.0
    %1719 = vmatprep.mubr.f32.mxu0 0.0
    %1720 = vmatmul.mubr.f32.gmra.mrb[0].mxu0 %v1632
    %v1721 = vpop.f32.mrb[0].mxu0
    %v1722 = vadd.f32 0.0, %v1721
    %v1723 = vpop.f32.mrb[0].mxu0
    %1724 = vmatprep.mubr.f32.mxu0 0.0
    %1725 = vmatmul.mubr.f32.gmra.mrb[0].mxu0 %v1635
    %v1726 = vpop.f32.mrb[0].mxu0
    %v1727 = vadd.f32 0.0, %v1726
    %v1728 = vpop.f32.mrb[0].mxu0
    %1729 = vmatprep.mubr.f32.mxu0 0.0
    %1730 = vmatmul.mubr.f32.gmra.mrb[0].mxu0 %v1638
    %v1731 = vpop.f32.mrb[0].mxu0
    %v1732 = vadd.f32 0.0, %v1731
    %v1733 = vpop.f32.mrb[0].mxu0
    %1734 = vmatprep.mubr.f32.mxu0 0.0
    %1735 = vmatmul.mubr.f32.gmra.mrb[0].mxu0 %v1641
    %v1736 = vpop.f32.mrb[0].mxu0
    %v1737 = vadd.f32 0.0, %v1736
    %v1738 = vpop.f32.mrb[0].mxu0
    %1739 = vdwg.mxu0
    %v1740 = vmul.f32 %v1722, 0.5
    %v1741 = vmul.f32 %v1727, 0.5
    %v1742 = vmul.f32 %v1732, 0.5
    %v1743 = vmul.f32 %v1737, 0.5
    %v1744 = vadd.f32 %v1740, %v58
    %v1745 = vadd.f32 %v1741, %v59
    %v1746 = vadd.f32 %v1742, %v60
    %v1747 = vadd.f32 %v1743, %v61
    %v1748 = vsel %vm412, %v1744, -inf
    %1749 = vmax.xlane.f32.xlu0 %v1748
    %v1750 = vpop.xlane.xlu0 %1749
    %v1751 = vsel %vm412, %v1745, -inf
    %1752 = vmax.xlane.f32.xlu0 %v1751
    %v1753 = vpop.xlane.xlu0 %1752
    %v1754 = vsel %vm412, %v1746, -inf
    %1755 = vmax.xlane.f32.xlu0 %v1754
    %v1756 = vpop.xlane.xlu0 %1755
    %v1757 = vsel %vm412, %v1747, -inf
    %1758 = vmax.xlane.f32.xlu0 %v1757
    %v1759 = vpop.xlane.xlu0 %1758
    %v1760 = vsub.f32 %v1744, %v1750
    %v1761 = vsub.f32 %v1745, %v1753
    %v1762 = vsub.f32 %v1746, %v1756
    %v1763 = vsub.f32 %v1747, %v1759
    %v1764 = vmul.f32 %v1760, 1.442695
    %v1765 = vpow.pop %v1764
    %v1766 = vmul.f32 %v1761, 1.442695
    %v1767 = vpow.pop %v1766
    %v1768 = vmul.f32 %v1762, 1.442695
    %v1769 = vpow.pop %v1768
    %v1770 = vmul.f32 %v1763, 1.442695
    %v1771 = vpow.pop %v1770
    %v1772 = vsel %vm412, %v1765, 0.0
    %1773 = vadd.xlane.f32.xlu0 %v1772
    %v1774 = vpop.xlane.xlu0 %1773
    %v1775 = vsel %vm412, %v1767, 0.0
    %1776 = vadd.xlane.f32.xlu0 %v1775
    %v1777 = vpop.xlane.xlu0 %1776
    %v1778 = vsel %vm412, %v1769, 0.0
    %1779 = vadd.xlane.f32.xlu0 %v1778
    %v1780 = vpop.xlane.xlu0 %1779
    %v1781 = vsel %vm412, %v1771, 0.0
    %1782 = vadd.xlane.f32.xlu0 %v1781
    %v1783 = vpop.xlane.xlu0 %1782
    %v1784 = vrcp.pop %v1774
    %v1785 = vrcp.pop %v1777
    %v1786 = vrcp.pop %v1780
    %v1787 = vrcp.pop %v1783
    %v1788 = vmul.f32 %v1765, %v1784
    %v1789 = vmul.f32 %v1767, %v1785
    %v1790 = vmul.f32 %v1769, %v1786
    %v1791 = vmul.f32 %v1771, %v1787
    %v1793 = vsel %vm412, %v1788, 0
    %v1796 = vsel %vm412, %v1789, 0
    %v1799 = vsel %vm412, %v1790, 0
    %v1802 = vsel %vm412, %v1791, 0
    %1804 = vmatprep.subr.mxu0 0.0
    %1805 = vmatpush1.msra.mxu0 %v1627
    %1806 = vmatprep.subr.mxu0 0.0
    %1807 = vmatpush1.msra.mxu0 %v1628
    %1808 = vmatprep.subr.mxu0 0.0
    %1809 = vmatpush1.msra.mxu0 %v1629
    %1810 = vmatprep.subr.mxu0 0.0
    %1811 = vmatpush1.msra.mxu0 %v1630
    %1812 = vmatprep.subr.mxu0 0.0
    %1813 = vmatpush1.msra.mxu0 0.0
    %1814 = vmatprep.subr.mxu0 0.0
    %1815 = vmatpush1.msra.mxu0 0.0
    %1816 = vmatprep.subr.mxu0 0.0
    %1817 = vmatpush1.msra.mxu0 0.0
    %1818 = vmatprep.subr.mxu0 0.0
    %1819 = vmatpush1.msra.mxu0 0.0
    %1820 = vmatprep.subr.mxu0 0.0
    %1821 = vmatpush1.msra.mxu0 0.0
    %1822 = vmatprep.subr.mxu0 0.0
    %1823 = vmatpush1.msra.mxu0 0.0
    %1824 = vmatprep.subr.mxu0 0.0
    %1825 = vmatpush1.msra.mxu0 0.0
    %1826 = vmatprep.subr.mxu0 0.0
    %1827 = vmatpush1.msra.mxu0 0.0
    %1828 = vmatprep.subr.mxu0 0.0
    %1829 = vmatpush1.msra.mxu0 0.0
    %1830 = vmatprep.subr.mxu0 0.0
    %1831 = vmatpush1.msra.mxu0 0.0
    %1832 = vmatprep.subr.mxu0 0.0
    %1833 = vmatpush1.msra.mxu0 0.0
    %1834 = vmatprep.subr.mxu0 0.0
    %1835 = vmatpush1.msra.mxu0 0.0
    %1836 = vmatprep.subr.mxu0 0.0
    %1837 = vmatpush1.msra.mxu0 0.0
    %1838 = vmatprep.subr.mxu0 0.0
    %1839 = vmatpush1.msra.mxu0 0.0
    %1840 = vmatprep.subr.mxu0 0.0
    %1841 = vmatpush1.msra.mxu0 0.0
    %1842 = vmatprep.subr.mxu0 0.0
    %1843 = vmatpush1.msra.mxu0 0.0
    %1844 = vmatprep.subr.mxu0 0.0
    %1845 = vmatpush1.msra.mxu0 0.0
    %1846 = vmatprep.subr.mxu0 0.0
    %1847 = vmatpush1.msra.mxu0 0.0
    %1848 = vmatprep.subr.mxu0 0.0
    %1849 = vmatpush1.msra.mxu0 0.0
    %1850 = vmatprep.subr.mxu0 0.0
    %1851 = vmatpush1.msra.mxu0 0.0
    %1852 = vmatprep.subr.mxu0 0.0
    %1853 = vmatpush1.msra.mxu0 0.0
    %1854 = vmatprep.subr.mxu0 0.0
    %1855 = vmatpush1.msra.mxu0 0.0
    %1856 = vmatprep.subr.mxu0 0.0
    %1857 = vmatpush1.msra.mxu0 0.0
    %1858 = vmatprep.subr.mxu0 0.0
    %1859 = vmatpush1.msra.mxu0 0.0
    %1860 = vmatprep.subr.mxu0 0.0
    %1861 = vmatpush1.msra.mxu0 0.0
    %1862 = vmatprep.subr.mxu0 0.0
    %1863 = vmatpush1.msra.mxu0 0.0
    %1864 = vmatprep.subr.mxu0 0.0
    %1865 = vmatpush1.msra.mxu0 0.0
    %1866 = vmatprep.subr.mxu0 0.0
    %1867 = vmatpush1.msra.mxu0 0.0
    %1868 = vmatprep.mubr.f32.mxu0 0.0
    %1869 = vmatmul.mubr.f32.gmra.mrb[0].mxu0 %v1793
    %v1870 = vpop.f32.mrb[0].mxu0
    %v1871 = vadd.f32 0.0, %v1870
    %v1872 = vpop.f32.mrb[0].mxu0
    %1873 = vmatprep.mubr.f32.mxu0 0.0
    %1874 = vmatmul.mubr.f32.gmra.mrb[0].mxu0 %v1796
    %v1875 = vpop.f32.mrb[0].mxu0
    %v1876 = vadd.f32 0.0, %v1875
    %v1877 = vpop.f32.mrb[0].mxu0
    %1878 = vmatprep.mubr.f32.mxu0 0.0
    %1879 = vmatmul.mubr.f32.gmra.mrb[0].mxu0 %v1799
    %v1880 = vpop.f32.mrb[0].mxu0
    %v1881 = vadd.f32 0.0, %v1880
    %v1882 = vpop.f32.mrb[0].mxu0
    %1883 = vmatprep.mubr.f32.mxu0 0.0
    %1884 = vmatmul.mubr.f32.gmra.mrb[0].mxu0 %v1802
    %v1885 = vpop.f32.mrb[0].mxu0
    %v1886 = vadd.f32 0.0, %v1885
    %v1887 = vpop.f32.mrb[0].mxu0
    %1888 = vdwg.mxu0
    %v1889 = vsel %vm1474, %v1871, 0.0
    %1890 = vadd.xlane.f32.xlu0 %v1889
    %v1891 = vpop.xlane.xlu0 %1890
    %v1892 = vsel %vm1474, %v1876, 0.0
    %1893 = vadd.xlane.f32.xlu0 %v1892
    %v1894 = vpop.xlane.xlu0 %1893
    %v1895 = vsel %vm1474, %v1881, 0.0
    %1896 = vadd.xlane.f32.xlu0 %v1895
    %v1897 = vpop.xlane.xlu0 %1896
    %v1898 = vsel %vm1474, %v1886, 0.0
    %1899 = vadd.xlane.f32.xlu0 %v1898
    %v1900 = vpop.xlane.xlu0 %1899
    %v1901 = vmul.f32 %v1891, 0.0625
    %v1902 = vmul.f32 %v1894, 0.0625
    %v1903 = vmul.f32 %v1897, 0.0625
    %v1904 = vmul.f32 %v1900, 0.0625
    %v1905 = vxor.u32 %v1901, 2147483648
    %v1906 = vxor.u32 %v1902, 2147483648
    %v1907 = vxor.u32 %v1903, 2147483648
    %v1908 = vxor.u32 %v1904, 2147483648
    %v1909 = vmul.f32 %v1905, 1.442695
    %v1910 = vpow.pop %v1909
    %v1911 = vmul.f32 %v1906, 1.442695
    %v1912 = vpow.pop %v1911
    %v1913 = vmul.f32 %v1907, 1.442695
    %v1914 = vpow.pop %v1913
    %v1915 = vmul.f32 %v1908, 1.442695
    %v1916 = vpow.pop %v1915
    %v1917 = vadd.f32 %v1910, 1.0
    %v1918 = vadd.f32 %v1912, 1.0
    %v1919 = vadd.f32 %v1914, 1.0
    %v1920 = vadd.f32 %v1916, 1.0
    %v1921 = vrcp.pop %v1917
    %v1922 = vmul.f32 1.0, %v1921
    %v1923 = vrcp.pop %v1918
    %v1924 = vmul.f32 1.0, %v1923
    %v1925 = vrcp.pop %v1919
    %v1926 = vmul.f32 1.0, %v1925
    %v1927 = vrcp.pop %v1920
    %v1928 = vmul.f32 1.0, %v1927
    %v1929 = vmul.f32 %v1922, %v1163
    %v1930 = vmul.f32 %v1922, %v1164
    %v1931 = vmul.f32 %v1924, %v1165
    %v1932 = vmul.f32 %v1924, %v1166
    %v1933 = vmul.f32 %v1926, %v1167
    %v1934 = vmul.f32 %v1926, %v1168
    %v1935 = vmul.f32 %v1928, %v1169
    %v1936 = vmul.f32 %v1928, %v1170
    %1937 = vst [vmem:[#allocation2] sm:$0xff] %v1929
    %1938 = vst [vmem:[#allocation2 + $0x8] sm:$0xff] %v1930
    %1939 = vst [vmem:[#allocation2 + $0x10] sm:$0xff] %v1931
    %1940 = vst [vmem:[#allocation2 + $0x18] sm:$0xff] %v1932
    %1941 = vst [vmem:[#allocation2 + $0x20] sm:$0xff] %v1933
    %1942 = vst [vmem:[#allocation2 + $0x28] sm:$0xff] %v1934
    %1943 = vst [vmem:[#allocation2 + $0x30] sm:$0xff] %v1935
    %1944 = vst [vmem:[#allocation2 + $0x38] sm:$0xff] %v1936
    // Predicated region
    $region38: #{tpu_custom_call.1} parent=1 // pred_check
      _
    $region39: #{tpu_custom_call.1} parent=1 // pred_check_branch
      %1946 = sbr.rel (0) target = $region41
    $region40: #{tpu_custom_call.1} parent=1 // pred_region
      %s1948 = ssub.s32 1024, 1024
      %1949 = vsyncadd [#allocation3], %s1948
      %s1950 = sshll.u32 [#allocation2], 4
      %s1951 = int_to_ptr.vmem [resolvable:$true] %s1950
      %1956 = dma.vmem_to_hbm [thread:$0]  %s1951, 1024, %s9, [#allocation3], 256, 256, 16
    $region41: #{tpu_custom_call.1} parent=1 // pred_fallthru
      _
    // Predicated region
    $region42: #{tpu_custom_call.1} parent=1 // pred_check
      _
    $region43: #{tpu_custom_call.1} parent=1 // pred_check_branch
      %1958 = sbr.rel (0) target = $region45
    $region44: #{tpu_custom_call.1} parent=1 // pred_region
      %1959 = dma.done [#allocation3], 1024
    $region45: #{tpu_custom_call.1} parent=1 // pred_fallthru
      _
    %1960 = vsyncpa [#allocation3], 1

</llo_original>
